<compile_context>
chip_gen: v7x
topology: tpu7x:2x2x1
jax: 0.10.0
libtpu: 0.0.40
codegen_flags: <defaults>
</compile_context>

<pallas_src>
import jax
import jax.numpy as jnp
from jax import lax
from jax.experimental import pallas as pl
from jax.experimental.pallas import tpu as pltpu

# ----------------------------- configuration ------------------------------
N, C_IN, C_OUT, H, W = 2, 4, 8, 16, 16
PAD, STRIDE, DIL = 1, 1, 1          # module defaults
EPS = 1e-5                          # BatchNorm2d default eps
NEG_SLOPE = 0.01                    # LeakyReLU default negative_slope

HP = H + 2 * PAD                    # padded height
LANES = W * C_OUT                   # 128: packed (w, o) lane axis
P = N * H * W                       # BN population size


# ------------------------------ Pallas kernel ------------------------------
def sparable_conv_kernel(xshift_ref, wtab_ref, gb_ref, out_ref):
    """Fused separable conv + train-mode BN + LeakyReLU (lane-dense).

    xshift_ref: (3, C_IN, N, HP, W*C_OUT)  padded input, pre-shifted by kw and
                                           replicated over o: lane = w*C_OUT+o
    wtab_ref:   (9*C_IN, W*C_OUT)          fused dw*pw weights,
                                           row = (kh*3+kw)*C_IN + c, tiled on w
    gb_ref:     (2, W*C_OUT)               BN gamma (row 0) / beta (row 1)
    out_ref:    (N*H, W*C_OUT)             lane-dense output slab (32, 128)
    """
    # ---- fused depthwise-3x3 + pointwise-1x1: 36 VPU FMAs on full vregs ----
    acc = jnp.zeros((N, H, LANES), dtype=jnp.float32)
    for c in range(C_IN):
        for kw in range(3):
            xc = xshift_ref[kw, c]                       # (N, HP, 128)
            for kh in range(3):
                patch = xc[:, kh:kh + H, :]              # (N, H, 128)
                row = (kh * 3 + kw) * C_IN + c
                acc = acc + patch * wtab_ref[row:row + 1, :]   # (1,128) bcast

    pw = acc.reshape(N * H, LANES)                       # (32, 128)

    # ---- BatchNorm2d, training-mode batch stats, single pass ---------------
    s1 = jnp.sum(pw, axis=0, keepdims=True)              # per-(w,o) sum
    s2 = jnp.sum(pw * pw, axis=0, keepdims=True)         # per-(w,o) sum of sq
    # Fold the W=16 lane groups (stride C_OUT) with lane rotations so every
    # lane ends up holding its channel's total (XLU slot, essentially free).
    for sh in (C_OUT, 2 * C_OUT, 4 * C_OUT, 8 * C_OUT):
        s1 = s1 + pltpu.roll(s1, sh, axis=1)
        s2 = s2 + pltpu.roll(s2, sh, axis=1)
    inv_p = 1.0 / float(P)
    mean = s1 * inv_p                                    # (1,128), per-o
    var = s2 * inv_p - mean * mean                       # biased (train) var

    gamma = gb_ref[0:1, :]
    beta = gb_ref[1:2, :]
    scale = gamma * lax.rsqrt(var + EPS)
    y = (pw - mean) * scale + beta

    # ---- LeakyReLU + full-width unmasked store ------------------------------
    out_ref[...] = jnp.where(y > 0, y, NEG_SLOPE * y)


# ------------------------------ host wrapper -------------------------------
@jax.jit
def sparable_conv(x_nchw, w_dw, w_pw, b_pw, gamma, beta):
    """x_nchw: (N, Cin, H, W); w_dw: (Cin, 1, 3, 3) [PyTorch layout];
    w_pw: (Cout, Cin, 1, 1); b_pw/gamma/beta: (Cout,). Returns NCHW output."""
    # b_pw is accepted for interface fidelity but not used: with train-mode BN,
    # mean(conv + b) = mean(conv) + b, so the bias cancels in (pw - mean).
    x = x_nchw.astype(jnp.float32)

    # Padded input, kw-shifted and replicated over output channels so every
    # kernel load is an aligned, fully lane-dense (., 128) slab.
    xpad = jnp.pad(x, ((0, 0), (0, 0), (PAD, PAD), (PAD, PAD)))  # (N,C,HP,WP)
    xshift = jnp.stack([xpad[:, :, :, kw:kw + W] for kw in range(3)], axis=0)
    xshift = jnp.transpose(xshift, (0, 2, 1, 3, 4))              # (3,C,N,HP,W)
    xshift = jnp.broadcast_to(xshift[..., None],
                              (3, C_IN, N, HP, W, C_OUT))
    xshift = xshift.reshape(3, C_IN, N, HP, LANES)               # (3,C,N,HP,128)

    # Fused effective weights: weff[kh,kw,c,o] = wdw[c,kh,kw] * wpw[o,c].
    wdw = w_dw[:, 0, :, :].astype(jnp.float32)                   # (Cin,3,3)
    wpw = w_pw[:, :, 0, 0].astype(jnp.float32)                   # (Cout,Cin)
    weff = wdw[:, :, :, None] * wpw.T[:, None, None, :]          # (Cin,3,3,Cout)
    weff = jnp.transpose(weff, (1, 2, 0, 3)).reshape(9 * C_IN, C_OUT)
    wtab = jnp.tile(weff, (1, W))                                # (36, 128)

    gb = jnp.concatenate(
        [jnp.tile(gamma.reshape(1, C_OUT).astype(jnp.float32), (1, W)),
         jnp.tile(beta.reshape(1, C_OUT).astype(jnp.float32), (1, W))],
        axis=0)                                                  # (2, 128)

    vmem = pl.BlockSpec(memory_space=pltpu.MemorySpace.VMEM)
    out2d = pl.pallas_call(
        sparable_conv_kernel,
        out_shape=jax.ShapeDtypeStruct((N * H, LANES), jnp.float32),
        in_specs=[vmem, vmem, vmem],
        out_specs=vmem,
    )(xshift, wtab, gb)

    # (N*H, W*Cout) -> (N, H, W, Cout) -> NCHW (fused under jit).
    return jnp.transpose(out2d.reshape(N, H, W, C_OUT), (0, 3, 1, 2))


# --------------------------- pure-JAX reference -----------------------------
def reference(x_nchw, w_dw, w_pw, b_pw, gamma, beta):
    dn = ("NCHW", "OIHW", "NCHW")
    dw = lax.conv_general_dilated(
        x_nchw, w_dw, window_strides=(STRIDE, STRIDE),
        padding=((PAD, PAD), (PAD, PAD)), rhs_dilation=(DIL, DIL),
        dimension_numbers=dn, feature_group_count=C_IN)
    pw = lax.conv_general_dilated(
        dw, w_pw, window_strides=(1, 1), padding="VALID", dimension_numbers=dn)
    pw = pw + b_pw.reshape(1, C_OUT, 1, 1)
    mean = jnp.mean(pw, axis=(0, 2, 3), keepdims=True)
    var = jnp.mean((pw - mean) ** 2, axis=(0, 2, 3), keepdims=True)
    y = (pw - mean) * lax.rsqrt(var + EPS)
    y = y * gamma.reshape(1, C_OUT, 1, 1) + beta.reshape(1, C_OUT, 1, 1)
    return jnp.where(y > 0, y, NEG_SLOPE * y)


# ---------------------------------- main ------------------------------------
if __name__ == "__main__":
    key = jax.random.PRNGKey(0)
    k_x, k_dw, k_pw, k_b, k_g, k_be = jax.random.split(key, 6)

    x = jax.random.normal(k_x, (N, C_IN, H, W), dtype=jnp.float32)
    # Parameter shapes match the PyTorch module's __init__.
    w_dw = jax.random.normal(k_dw, (C_IN, 1, 3, 3), dtype=jnp.float32) * 0.2
    w_pw = jax.random.normal(k_pw, (C_OUT, C_IN, 1, 1), dtype=jnp.float32) * 0.2
    b_pw = jax.random.normal(k_b, (C_OUT,), dtype=jnp.float32) * 0.1
    gamma = 1.0 + 0.1 * jax.random.normal(k_g, (C_OUT,), dtype=jnp.float32)
    beta = 0.1 * jax.random.normal(k_be, (C_OUT,), dtype=jnp.float32)

    out = sparable_conv(x, w_dw, w_pw, b_pw, gamma, beta)
    out = jax.block_until_ready(out)

    ref = jax.block_until_ready(reference(x, w_dw, w_pw, b_pw, gamma, beta))
    assert out.shape == (N, C_OUT, H, W)
    assert jnp.allclose(out, ref, atol=1e-4, rtol=1e-4), (
        f"max abs err {jnp.max(jnp.abs(out - ref))}")

    print("KERNEL_OK")
</pallas_src>

<mosaic_0001>
module attributes {stable_mosaic.version = 11 : i64} {
  func.func @sparable_conv_kernel(%arg0: memref<3x4x2x18x128xf32, #tpu.memory_space<vmem>>, %arg1: memref<36x128xf32, #tpu.memory_space<vmem>>, %arg2: memref<2x128xf32, #tpu.memory_space<vmem>>, %arg3: memref<32x128xf32, #tpu.memory_space<vmem>>) attributes {dimension_semantics = [], scalar_prefetch = 0 : i64, scratch_operands = 0 : i64, tpu.core_type = #tpu.core_type<tc>} {
    %cst = arith.constant 0.000000e+00 : f32
    %0 = vector.broadcast %cst : f32 to vector<2x16x128xf32>
    %c0 = arith.constant 0 : index
    %c0_0 = arith.constant 0 : index
    %c0_1 = arith.constant 0 : index
    %c0_2 = arith.constant 0 : index
    %c0_3 = arith.constant 0 : index
    %1 = vector.load %arg0[%c0, %c0_0, %c0_1, %c0_2, %c0_3] : memref<3x4x2x18x128xf32, #tpu.memory_space<vmem>>, vector<1x1x2x18x128xf32>
    %2 = vector.shape_cast %1 : vector<1x1x2x18x128xf32> to vector<2x18x128xf32>
    %3 = vector.extract_strided_slice %2 {offsets = [0, 0, 0], sizes = [2, 16, 128], strides = [1, 1, 1]} : vector<2x18x128xf32> to vector<2x16x128xf32>
    %c0_4 = arith.constant 0 : index
    %c0_5 = arith.constant 0 : index
    %4 = vector.load %arg1[%c0_4, %c0_5] : memref<36x128xf32, #tpu.memory_space<vmem>>, vector<1x128xf32>
    %5 = vector.shape_cast %4 : vector<1x128xf32> to vector<1x1x128xf32>
    %6 = vector.broadcast %5 : vector<1x1x128xf32> to vector<2x16x128xf32>
    %7 = arith.mulf %3, %6 : vector<2x16x128xf32>
    %8 = arith.addf %0, %7 : vector<2x16x128xf32>
    %9 = vector.extract_strided_slice %2 {offsets = [0, 1, 0], sizes = [2, 16, 128], strides = [1, 1, 1]} : vector<2x18x128xf32> to vector<2x16x128xf32>
    %c12 = arith.constant 12 : index
    %c0_6 = arith.constant 0 : index
    %10 = vector.load %arg1[%c12, %c0_6] : memref<36x128xf32, #tpu.memory_space<vmem>>, vector<1x128xf32>
    %11 = vector.shape_cast %10 : vector<1x128xf32> to vector<1x1x128xf32>
    %12 = vector.broadcast %11 : vector<1x1x128xf32> to vector<2x16x128xf32>
    %13 = arith.mulf %9, %12 : vector<2x16x128xf32>
    %14 = arith.addf %8, %13 : vector<2x16x128xf32>
    %15 = vector.extract_strided_slice %2 {offsets = [0, 2, 0], sizes = [2, 16, 128], strides = [1, 1, 1]} : vector<2x18x128xf32> to vector<2x16x128xf32>
    %c24 = arith.constant 24 : index
    %c0_7 = arith.constant 0 : index
    %16 = vector.load %arg1[%c24, %c0_7] : memref<36x128xf32, #tpu.memory_space<vmem>>, vector<1x128xf32>
    %17 = vector.shape_cast %16 : vector<1x128xf32> to vector<1x1x128xf32>
    %18 = vector.broadcast %17 : vector<1x1x128xf32> to vector<2x16x128xf32>
    %19 = arith.mulf %15, %18 : vector<2x16x128xf32>
    %20 = arith.addf %14, %19 : vector<2x16x128xf32>
    %c1 = arith.constant 1 : index
    %c0_8 = arith.constant 0 : index
    %c0_9 = arith.constant 0 : index
    %c0_10 = arith.constant 0 : index
    %c0_11 = arith.constant 0 : index
    %21 = vector.load %arg0[%c1, %c0_8, %c0_9, %c0_10, %c0_11] : memref<3x4x2x18x128xf32, #tpu.memory_space<vmem>>, vector<1x1x2x18x128xf32>
    %22 = vector.shape_cast %21 : vector<1x1x2x18x128xf32> to vector<2x18x128xf32>
    %23 = vector.extract_strided_slice %22 {offsets = [0, 0, 0], sizes = [2, 16, 128], strides = [1, 1, 1]} : vector<2x18x128xf32> to vector<2x16x128xf32>
    %c4 = arith.constant 4 : index
    %c0_12 = arith.constant 0 : index
    %24 = vector.load %arg1[%c4, %c0_12] : memref<36x128xf32, #tpu.memory_space<vmem>>, vector<1x128xf32>
    %25 = vector.shape_cast %24 : vector<1x128xf32> to vector<1x1x128xf32>
    %26 = vector.broadcast %25 : vector<1x1x128xf32> to vector<2x16x128xf32>
    %27 = arith.mulf %23, %26 : vector<2x16x128xf32>
    %28 = arith.addf %20, %27 : vector<2x16x128xf32>
    %29 = vector.extract_strided_slice %22 {offsets = [0, 1, 0], sizes = [2, 16, 128], strides = [1, 1, 1]} : vector<2x18x128xf32> to vector<2x16x128xf32>
    %c16 = arith.constant 16 : index
    %c0_13 = arith.constant 0 : index
    %30 = vector.load %arg1[%c16, %c0_13] : memref<36x128xf32, #tpu.memory_space<vmem>>, vector<1x128xf32>
    %31 = vector.shape_cast %30 : vector<1x128xf32> to vector<1x1x128xf32>
    %32 = vector.broadcast %31 : vector<1x1x128xf32> to vector<2x16x128xf32>
    %33 = arith.mulf %29, %32 : vector<2x16x128xf32>
    %34 = arith.addf %28, %33 : vector<2x16x128xf32>
    %35 = vector.extract_strided_slice %22 {offsets = [0, 2, 0], sizes = [2, 16, 128], strides = [1, 1, 1]} : vector<2x18x128xf32> to vector<2x16x128xf32>
    %c28 = arith.constant 28 : index
    %c0_14 = arith.constant 0 : index
    %36 = vector.load %arg1[%c28, %c0_14] : memref<36x128xf32, #tpu.memory_space<vmem>>, vector<1x128xf32>
    %37 = vector.shape_cast %36 : vector<1x128xf32> to vector<1x1x128xf32>
    %38 = vector.broadcast %37 : vector<1x1x128xf32> to vector<2x16x128xf32>
    %39 = arith.mulf %35, %38 : vector<2x16x128xf32>
    %40 = arith.addf %34, %39 : vector<2x16x128xf32>
    %c2 = arith.constant 2 : index
    %c0_15 = arith.constant 0 : index
    %c0_16 = arith.constant 0 : index
    %c0_17 = arith.constant 0 : index
    %c0_18 = arith.constant 0 : index
    %41 = vector.load %arg0[%c2, %c0_15, %c0_16, %c0_17, %c0_18] : memref<3x4x2x18x128xf32, #tpu.memory_space<vmem>>, vector<1x1x2x18x128xf32>
    %42 = vector.shape_cast %41 : vector<1x1x2x18x128xf32> to vector<2x18x128xf32>
    %43 = vector.extract_strided_slice %42 {offsets = [0, 0, 0], sizes = [2, 16, 128], strides = [1, 1, 1]} : vector<2x18x128xf32> to vector<2x16x128xf32>
    %c8 = arith.constant 8 : index
    %c0_19 = arith.constant 0 : index
    %44 = vector.load %arg1[%c8, %c0_19] : memref<36x128xf32, #tpu.memory_space<vmem>>, vector<1x128xf32>
    %45 = vector.shape_cast %44 : vector<1x128xf32> to vector<1x1x128xf32>
    %46 = vector.broadcast %45 : vector<1x1x128xf32> to vector<2x16x128xf32>
    %47 = arith.mulf %43, %46 : vector<2x16x128xf32>
    %48 = arith.addf %40, %47 : vector<2x16x128xf32>
    %49 = vector.extract_strided_slice %42 {offsets = [0, 1, 0], sizes = [2, 16, 128], strides = [1, 1, 1]} : vector<2x18x128xf32> to vector<2x16x128xf32>
    %c20 = arith.constant 20 : index
    %c0_20 = arith.constant 0 : index
    %50 = vector.load %arg1[%c20, %c0_20] : memref<36x128xf32, #tpu.memory_space<vmem>>, vector<1x128xf32>
    %51 = vector.shape_cast %50 : vector<1x128xf32> to vector<1x1x128xf32>
    %52 = vector.broadcast %51 : vector<1x1x128xf32> to vector<2x16x128xf32>
    %53 = arith.mulf %49, %52 : vector<2x16x128xf32>
    %54 = arith.addf %48, %53 : vector<2x16x128xf32>
    %55 = vector.extract_strided_slice %42 {offsets = [0, 2, 0], sizes = [2, 16, 128], strides = [1, 1, 1]} : vector<2x18x128xf32> to vector<2x16x128xf32>
    %c32 = arith.constant 32 : index
    %c0_21 = arith.constant 0 : index
    %56 = vector.load %arg1[%c32, %c0_21] : memref<36x128xf32, #tpu.memory_space<vmem>>, vector<1x128xf32>
    %57 = vector.shape_cast %56 : vector<1x128xf32> to vector<1x1x128xf32>
    %58 = vector.broadcast %57 : vector<1x1x128xf32> to vector<2x16x128xf32>
    %59 = arith.mulf %55, %58 : vector<2x16x128xf32>
    %60 = arith.addf %54, %59 : vector<2x16x128xf32>
    %c0_22 = arith.constant 0 : index
    %c1_23 = arith.constant 1 : index
    %c0_24 = arith.constant 0 : index
    %c0_25 = arith.constant 0 : index
    %c0_26 = arith.constant 0 : index
    %61 = vector.load %arg0[%c0_22, %c1_23, %c0_24, %c0_25, %c0_26] : memref<3x4x2x18x128xf32, #tpu.memory_space<vmem>>, vector<1x1x2x18x128xf32>
    %62 = vector.shape_cast %61 : vector<1x1x2x18x128xf32> to vector<2x18x128xf32>
    %63 = vector.extract_strided_slice %62 {offsets = [0, 0, 0], sizes = [2, 16, 128], strides = [1, 1, 1]} : vector<2x18x128xf32> to vector<2x16x128xf32>
    %c1_27 = arith.constant 1 : index
    %c0_28 = arith.constant 0 : index
    %64 = vector.load %arg1[%c1_27, %c0_28] : memref<36x128xf32, #tpu.memory_space<vmem>>, vector<1x128xf32>
    %65 = vector.shape_cast %64 : vector<1x128xf32> to vector<1x1x128xf32>
    %66 = vector.broadcast %65 : vector<1x1x128xf32> to vector<2x16x128xf32>
    %67 = arith.mulf %63, %66 : vector<2x16x128xf32>
    %68 = arith.addf %60, %67 : vector<2x16x128xf32>
    %69 = vector.extract_strided_slice %62 {offsets = [0, 1, 0], sizes = [2, 16, 128], strides = [1, 1, 1]} : vector<2x18x128xf32> to vector<2x16x128xf32>
    %c13 = arith.constant 13 : index
    %c0_29 = arith.constant 0 : index
    %70 = vector.load %arg1[%c13, %c0_29] : memref<36x128xf32, #tpu.memory_space<vmem>>, vector<1x128xf32>
    %71 = vector.shape_cast %70 : vector<1x128xf32> to vector<1x1x128xf32>
    %72 = vector.broadcast %71 : vector<1x1x128xf32> to vector<2x16x128xf32>
    %73 = arith.mulf %69, %72 : vector<2x16x128xf32>
    %74 = arith.addf %68, %73 : vector<2x16x128xf32>
    %75 = vector.extract_strided_slice %62 {offsets = [0, 2, 0], sizes = [2, 16, 128], strides = [1, 1, 1]} : vector<2x18x128xf32> to vector<2x16x128xf32>
    %c25 = arith.constant 25 : index
    %c0_30 = arith.constant 0 : index
    %76 = vector.load %arg1[%c25, %c0_30] : memref<36x128xf32, #tpu.memory_space<vmem>>, vector<1x128xf32>
    %77 = vector.shape_cast %76 : vector<1x128xf32> to vector<1x1x128xf32>
    %78 = vector.broadcast %77 : vector<1x1x128xf32> to vector<2x16x128xf32>
    %79 = arith.mulf %75, %78 : vector<2x16x128xf32>
    %80 = arith.addf %74, %79 : vector<2x16x128xf32>
    %c1_31 = arith.constant 1 : index
    %c1_32 = arith.constant 1 : index
    %c0_33 = arith.constant 0 : index
    %c0_34 = arith.constant 0 : index
    %c0_35 = arith.constant 0 : index
    %81 = vector.load %arg0[%c1_31, %c1_32, %c0_33, %c0_34, %c0_35] : memref<3x4x2x18x128xf32, #tpu.memory_space<vmem>>, vector<1x1x2x18x128xf32>
    %82 = vector.shape_cast %81 : vector<1x1x2x18x128xf32> to vector<2x18x128xf32>
    %83 = vector.extract_strided_slice %82 {offsets = [0, 0, 0], sizes = [2, 16, 128], strides = [1, 1, 1]} : vector<2x18x128xf32> to vector<2x16x128xf32>
    %c5 = arith.constant 5 : index
    %c0_36 = arith.constant 0 : index
    %84 = vector.load %arg1[%c5, %c0_36] : memref<36x128xf32, #tpu.memory_space<vmem>>, vector<1x128xf32>
    %85 = vector.shape_cast %84 : vector<1x128xf32> to vector<1x1x128xf32>
    %86 = vector.broadcast %85 : vector<1x1x128xf32> to vector<2x16x128xf32>
    %87 = arith.mulf %83, %86 : vector<2x16x128xf32>
    %88 = arith.addf %80, %87 : vector<2x16x128xf32>
    %89 = vector.extract_strided_slice %82 {offsets = [0, 1, 0], sizes = [2, 16, 128], strides = [1, 1, 1]} : vector<2x18x128xf32> to vector<2x16x128xf32>
    %c17 = arith.constant 17 : index
    %c0_37 = arith.constant 0 : index
    %90 = vector.load %arg1[%c17, %c0_37] : memref<36x128xf32, #tpu.memory_space<vmem>>, vector<1x128xf32>
    %91 = vector.shape_cast %90 : vector<1x128xf32> to vector<1x1x128xf32>
    %92 = vector.broadcast %91 : vector<1x1x128xf32> to vector<2x16x128xf32>
    %93 = arith.mulf %89, %92 : vector<2x16x128xf32>
    %94 = arith.addf %88, %93 : vector<2x16x128xf32>
    %95 = vector.extract_strided_slice %82 {offsets = [0, 2, 0], sizes = [2, 16, 128], strides = [1, 1, 1]} : vector<2x18x128xf32> to vector<2x16x128xf32>
    %c29 = arith.constant 29 : index
    %c0_38 = arith.constant 0 : index
    %96 = vector.load %arg1[%c29, %c0_38] : memref<36x128xf32, #tpu.memory_space<vmem>>, vector<1x128xf32>
    %97 = vector.shape_cast %96 : vector<1x128xf32> to vector<1x1x128xf32>
    %98 = vector.broadcast %97 : vector<1x1x128xf32> to vector<2x16x128xf32>
    %99 = arith.mulf %95, %98 : vector<2x16x128xf32>
    %100 = arith.addf %94, %99 : vector<2x16x128xf32>
    %c2_39 = arith.constant 2 : index
    %c1_40 = arith.constant 1 : index
    %c0_41 = arith.constant 0 : index
    %c0_42 = arith.constant 0 : index
    %c0_43 = arith.constant 0 : index
    %101 = vector.load %arg0[%c2_39, %c1_40, %c0_41, %c0_42, %c0_43] : memref<3x4x2x18x128xf32, #tpu.memory_space<vmem>>, vector<1x1x2x18x128xf32>
    %102 = vector.shape_cast %101 : vector<1x1x2x18x128xf32> to vector<2x18x128xf32>
    %103 = vector.extract_strided_slice %102 {offsets = [0, 0, 0], sizes = [2, 16, 128], strides = [1, 1, 1]} : vector<2x18x128xf32> to vector<2x16x128xf32>
    %c9 = arith.constant 9 : index
    %c0_44 = arith.constant 0 : index
    %104 = vector.load %arg1[%c9, %c0_44] : memref<36x128xf32, #tpu.memory_space<vmem>>, vector<1x128xf32>
    %105 = vector.shape_cast %104 : vector<1x128xf32> to vector<1x1x128xf32>
    %106 = vector.broadcast %105 : vector<1x1x128xf32> to vector<2x16x128xf32>
    %107 = arith.mulf %103, %106 : vector<2x16x128xf32>
    %108 = arith.addf %100, %107 : vector<2x16x128xf32>
    %109 = vector.extract_strided_slice %102 {offsets = [0, 1, 0], sizes = [2, 16, 128], strides = [1, 1, 1]} : vector<2x18x128xf32> to vector<2x16x128xf32>
    %c21 = arith.constant 21 : index
    %c0_45 = arith.constant 0 : index
    %110 = vector.load %arg1[%c21, %c0_45] : memref<36x128xf32, #tpu.memory_space<vmem>>, vector<1x128xf32>
    %111 = vector.shape_cast %110 : vector<1x128xf32> to vector<1x1x128xf32>
    %112 = vector.broadcast %111 : vector<1x1x128xf32> to vector<2x16x128xf32>
    %113 = arith.mulf %109, %112 : vector<2x16x128xf32>
    %114 = arith.addf %108, %113 : vector<2x16x128xf32>
    %115 = vector.extract_strided_slice %102 {offsets = [0, 2, 0], sizes = [2, 16, 128], strides = [1, 1, 1]} : vector<2x18x128xf32> to vector<2x16x128xf32>
    %c33 = arith.constant 33 : index
    %c0_46 = arith.constant 0 : index
    %116 = vector.load %arg1[%c33, %c0_46] : memref<36x128xf32, #tpu.memory_space<vmem>>, vector<1x128xf32>
    %117 = vector.shape_cast %116 : vector<1x128xf32> to vector<1x1x128xf32>
    %118 = vector.broadcast %117 : vector<1x1x128xf32> to vector<2x16x128xf32>
    %119 = arith.mulf %115, %118 : vector<2x16x128xf32>
    %120 = arith.addf %114, %119 : vector<2x16x128xf32>
    %c0_47 = arith.constant 0 : index
    %c2_48 = arith.constant 2 : index
    %c0_49 = arith.constant 0 : index
    %c0_50 = arith.constant 0 : index
    %c0_51 = arith.constant 0 : index
    %121 = vector.load %arg0[%c0_47, %c2_48, %c0_49, %c0_50, %c0_51] : memref<3x4x2x18x128xf32, #tpu.memory_space<vmem>>, vector<1x1x2x18x128xf32>
    %122 = vector.shape_cast %121 : vector<1x1x2x18x128xf32> to vector<2x18x128xf32>
    %123 = vector.extract_strided_slice %122 {offsets = [0, 0, 0], sizes = [2, 16, 128], strides = [1, 1, 1]} : vector<2x18x128xf32> to vector<2x16x128xf32>
    %c2_52 = arith.constant 2 : index
    %c0_53 = arith.constant 0 : index
    %124 = vector.load %arg1[%c2_52, %c0_53] : memref<36x128xf32, #tpu.memory_space<vmem>>, vector<1x128xf32>
    %125 = vector.shape_cast %124 : vector<1x128xf32> to vector<1x1x128xf32>
    %126 = vector.broadcast %125 : vector<1x1x128xf32> to vector<2x16x128xf32>
    %127 = arith.mulf %123, %126 : vector<2x16x128xf32>
    %128 = arith.addf %120, %127 : vector<2x16x128xf32>
    %129 = vector.extract_strided_slice %122 {offsets = [0, 1, 0], sizes = [2, 16, 128], strides = [1, 1, 1]} : vector<2x18x128xf32> to vector<2x16x128xf32>
    %c14 = arith.constant 14 : index
    %c0_54 = arith.constant 0 : index
    %130 = vector.load %arg1[%c14, %c0_54] : memref<36x128xf32, #tpu.memory_space<vmem>>, vector<1x128xf32>
    %131 = vector.shape_cast %130 : vector<1x128xf32> to vector<1x1x128xf32>
    %132 = vector.broadcast %131 : vector<1x1x128xf32> to vector<2x16x128xf32>
    %133 = arith.mulf %129, %132 : vector<2x16x128xf32>
    %134 = arith.addf %128, %133 : vector<2x16x128xf32>
    %135 = vector.extract_strided_slice %122 {offsets = [0, 2, 0], sizes = [2, 16, 128], strides = [1, 1, 1]} : vector<2x18x128xf32> to vector<2x16x128xf32>
    %c26 = arith.constant 26 : index
    %c0_55 = arith.constant 0 : index
    %136 = vector.load %arg1[%c26, %c0_55] : memref<36x128xf32, #tpu.memory_space<vmem>>, vector<1x128xf32>
    %137 = vector.shape_cast %136 : vector<1x128xf32> to vector<1x1x128xf32>
    %138 = vector.broadcast %137 : vector<1x1x128xf32> to vector<2x16x128xf32>
    %139 = arith.mulf %135, %138 : vector<2x16x128xf32>
    %140 = arith.addf %134, %139 : vector<2x16x128xf32>
    %c1_56 = arith.constant 1 : index
    %c2_57 = arith.constant 2 : index
    %c0_58 = arith.constant 0 : index
    %c0_59 = arith.constant 0 : index
    %c0_60 = arith.constant 0 : index
    %141 = vector.load %arg0[%c1_56, %c2_57, %c0_58, %c0_59, %c0_60] : memref<3x4x2x18x128xf32, #tpu.memory_space<vmem>>, vector<1x1x2x18x128xf32>
    %142 = vector.shape_cast %141 : vector<1x1x2x18x128xf32> to vector<2x18x128xf32>
    %143 = vector.extract_strided_slice %142 {offsets = [0, 0, 0], sizes = [2, 16, 128], strides = [1, 1, 1]} : vector<2x18x128xf32> to vector<2x16x128xf32>
    %c6 = arith.constant 6 : index
    %c0_61 = arith.constant 0 : index
    %144 = vector.load %arg1[%c6, %c0_61] : memref<36x128xf32, #tpu.memory_space<vmem>>, vector<1x128xf32>
    %145 = vector.shape_cast %144 : vector<1x128xf32> to vector<1x1x128xf32>
    %146 = vector.broadcast %145 : vector<1x1x128xf32> to vector<2x16x128xf32>
    %147 = arith.mulf %143, %146 : vector<2x16x128xf32>
    %148 = arith.addf %140, %147 : vector<2x16x128xf32>
    %149 = vector.extract_strided_slice %142 {offsets = [0, 1, 0], sizes = [2, 16, 128], strides = [1, 1, 1]} : vector<2x18x128xf32> to vector<2x16x128xf32>
    %c18 = arith.constant 18 : index
    %c0_62 = arith.constant 0 : index
    %150 = vector.load %arg1[%c18, %c0_62] : memref<36x128xf32, #tpu.memory_space<vmem>>, vector<1x128xf32>
    %151 = vector.shape_cast %150 : vector<1x128xf32> to vector<1x1x128xf32>
    %152 = vector.broadcast %151 : vector<1x1x128xf32> to vector<2x16x128xf32>
    %153 = arith.mulf %149, %152 : vector<2x16x128xf32>
    %154 = arith.addf %148, %153 : vector<2x16x128xf32>
    %155 = vector.extract_strided_slice %142 {offsets = [0, 2, 0], sizes = [2, 16, 128], strides = [1, 1, 1]} : vector<2x18x128xf32> to vector<2x16x128xf32>
    %c30 = arith.constant 30 : index
    %c0_63 = arith.constant 0 : index
    %156 = vector.load %arg1[%c30, %c0_63] : memref<36x128xf32, #tpu.memory_space<vmem>>, vector<1x128xf32>
    %157 = vector.shape_cast %156 : vector<1x128xf32> to vector<1x1x128xf32>
    %158 = vector.broadcast %157 : vector<1x1x128xf32> to vector<2x16x128xf32>
    %159 = arith.mulf %155, %158 : vector<2x16x128xf32>
    %160 = arith.addf %154, %159 : vector<2x16x128xf32>
    %c2_64 = arith.constant 2 : index
    %c2_65 = arith.constant 2 : index
    %c0_66 = arith.constant 0 : index
    %c0_67 = arith.constant 0 : index
    %c0_68 = arith.constant 0 : index
    %161 = vector.load %arg0[%c2_64, %c2_65, %c0_66, %c0_67, %c0_68] : memref<3x4x2x18x128xf32, #tpu.memory_space<vmem>>, vector<1x1x2x18x128xf32>
    %162 = vector.shape_cast %161 : vector<1x1x2x18x128xf32> to vector<2x18x128xf32>
    %163 = vector.extract_strided_slice %162 {offsets = [0, 0, 0], sizes = [2, 16, 128], strides = [1, 1, 1]} : vector<2x18x128xf32> to vector<2x16x128xf32>
    %c10 = arith.constant 10 : index
    %c0_69 = arith.constant 0 : index
    %164 = vector.load %arg1[%c10, %c0_69] : memref<36x128xf32, #tpu.memory_space<vmem>>, vector<1x128xf32>
    %165 = vector.shape_cast %164 : vector<1x128xf32> to vector<1x1x128xf32>
    %166 = vector.broadcast %165 : vector<1x1x128xf32> to vector<2x16x128xf32>
    %167 = arith.mulf %163, %166 : vector<2x16x128xf32>
    %168 = arith.addf %160, %167 : vector<2x16x128xf32>
    %169 = vector.extract_strided_slice %162 {offsets = [0, 1, 0], sizes = [2, 16, 128], strides = [1, 1, 1]} : vector<2x18x128xf32> to vector<2x16x128xf32>
    %c22 = arith.constant 22 : index
    %c0_70 = arith.constant 0 : index
    %170 = vector.load %arg1[%c22, %c0_70] : memref<36x128xf32, #tpu.memory_space<vmem>>, vector<1x128xf32>
    %171 = vector.shape_cast %170 : vector<1x128xf32> to vector<1x1x128xf32>
    %172 = vector.broadcast %171 : vector<1x1x128xf32> to vector<2x16x128xf32>
    %173 = arith.mulf %169, %172 : vector<2x16x128xf32>
    %174 = arith.addf %168, %173 : vector<2x16x128xf32>
    %175 = vector.extract_strided_slice %162 {offsets = [0, 2, 0], sizes = [2, 16, 128], strides = [1, 1, 1]} : vector<2x18x128xf32> to vector<2x16x128xf32>
    %c34 = arith.constant 34 : index
    %c0_71 = arith.constant 0 : index
    %176 = vector.load %arg1[%c34, %c0_71] : memref<36x128xf32, #tpu.memory_space<vmem>>, vector<1x128xf32>
    %177 = vector.shape_cast %176 : vector<1x128xf32> to vector<1x1x128xf32>
    %178 = vector.broadcast %177 : vector<1x1x128xf32> to vector<2x16x128xf32>
    %179 = arith.mulf %175, %178 : vector<2x16x128xf32>
    %180 = arith.addf %174, %179 : vector<2x16x128xf32>
    %c0_72 = arith.constant 0 : index
    %c3 = arith.constant 3 : index
    %c0_73 = arith.constant 0 : index
    %c0_74 = arith.constant 0 : index
    %c0_75 = arith.constant 0 : index
    %181 = vector.load %arg0[%c0_72, %c3, %c0_73, %c0_74, %c0_75] : memref<3x4x2x18x128xf32, #tpu.memory_space<vmem>>, vector<1x1x2x18x128xf32>
    %182 = vector.shape_cast %181 : vector<1x1x2x18x128xf32> to vector<2x18x128xf32>
    %183 = vector.extract_strided_slice %182 {offsets = [0, 0, 0], sizes = [2, 16, 128], strides = [1, 1, 1]} : vector<2x18x128xf32> to vector<2x16x128xf32>
    %c3_76 = arith.constant 3 : index
    %c0_77 = arith.constant 0 : index
    %184 = vector.load %arg1[%c3_76, %c0_77] : memref<36x128xf32, #tpu.memory_space<vmem>>, vector<1x128xf32>
    %185 = vector.shape_cast %184 : vector<1x128xf32> to vector<1x1x128xf32>
    %186 = vector.broadcast %185 : vector<1x1x128xf32> to vector<2x16x128xf32>
    %187 = arith.mulf %183, %186 : vector<2x16x128xf32>
    %188 = arith.addf %180, %187 : vector<2x16x128xf32>
    %189 = vector.extract_strided_slice %182 {offsets = [0, 1, 0], sizes = [2, 16, 128], strides = [1, 1, 1]} : vector<2x18x128xf32> to vector<2x16x128xf32>
    %c15 = arith.constant 15 : index
    %c0_78 = arith.constant 0 : index
    %190 = vector.load %arg1[%c15, %c0_78] : memref<36x128xf32, #tpu.memory_space<vmem>>, vector<1x128xf32>
    %191 = vector.shape_cast %190 : vector<1x128xf32> to vector<1x1x128xf32>
    %192 = vector.broadcast %191 : vector<1x1x128xf32> to vector<2x16x128xf32>
    %193 = arith.mulf %189, %192 : vector<2x16x128xf32>
    %194 = arith.addf %188, %193 : vector<2x16x128xf32>
    %195 = vector.extract_strided_slice %182 {offsets = [0, 2, 0], sizes = [2, 16, 128], strides = [1, 1, 1]} : vector<2x18x128xf32> to vector<2x16x128xf32>
    %c27 = arith.constant 27 : index
    %c0_79 = arith.constant 0 : index
    %196 = vector.load %arg1[%c27, %c0_79] : memref<36x128xf32, #tpu.memory_space<vmem>>, vector<1x128xf32>
    %197 = vector.shape_cast %196 : vector<1x128xf32> to vector<1x1x128xf32>
    %198 = vector.broadcast %197 : vector<1x1x128xf32> to vector<2x16x128xf32>
    %199 = arith.mulf %195, %198 : vector<2x16x128xf32>
    %200 = arith.addf %194, %199 : vector<2x16x128xf32>
    %c1_80 = arith.constant 1 : index
    %c3_81 = arith.constant 3 : index
    %c0_82 = arith.constant 0 : index
    %c0_83 = arith.constant 0 : index
    %c0_84 = arith.constant 0 : index
    %201 = vector.load %arg0[%c1_80, %c3_81, %c0_82, %c0_83, %c0_84] : memref<3x4x2x18x128xf32, #tpu.memory_space<vmem>>, vector<1x1x2x18x128xf32>
    %202 = vector.shape_cast %201 : vector<1x1x2x18x128xf32> to vector<2x18x128xf32>
    %203 = vector.extract_strided_slice %202 {offsets = [0, 0, 0], sizes = [2, 16, 128], strides = [1, 1, 1]} : vector<2x18x128xf32> to vector<2x16x128xf32>
    %c7 = arith.constant 7 : index
    %c0_85 = arith.constant 0 : index
    %204 = vector.load %arg1[%c7, %c0_85] : memref<36x128xf32, #tpu.memory_space<vmem>>, vector<1x128xf32>
    %205 = vector.shape_cast %204 : vector<1x128xf32> to vector<1x1x128xf32>
    %206 = vector.broadcast %205 : vector<1x1x128xf32> to vector<2x16x128xf32>
    %207 = arith.mulf %203, %206 : vector<2x16x128xf32>
    %208 = arith.addf %200, %207 : vector<2x16x128xf32>
    %209 = vector.extract_strided_slice %202 {offsets = [0, 1, 0], sizes = [2, 16, 128], strides = [1, 1, 1]} : vector<2x18x128xf32> to vector<2x16x128xf32>
    %c19 = arith.constant 19 : index
    %c0_86 = arith.constant 0 : index
    %210 = vector.load %arg1[%c19, %c0_86] : memref<36x128xf32, #tpu.memory_space<vmem>>, vector<1x128xf32>
    %211 = vector.shape_cast %210 : vector<1x128xf32> to vector<1x1x128xf32>
    %212 = vector.broadcast %211 : vector<1x1x128xf32> to vector<2x16x128xf32>
    %213 = arith.mulf %209, %212 : vector<2x16x128xf32>
    %214 = arith.addf %208, %213 : vector<2x16x128xf32>
    %215 = vector.extract_strided_slice %202 {offsets = [0, 2, 0], sizes = [2, 16, 128], strides = [1, 1, 1]} : vector<2x18x128xf32> to vector<2x16x128xf32>
    %c31 = arith.constant 31 : index
    %c0_87 = arith.constant 0 : index
    %216 = vector.load %arg1[%c31, %c0_87] : memref<36x128xf32, #tpu.memory_space<vmem>>, vector<1x128xf32>
    %217 = vector.shape_cast %216 : vector<1x128xf32> to vector<1x1x128xf32>
    %218 = vector.broadcast %217 : vector<1x1x128xf32> to vector<2x16x128xf32>
    %219 = arith.mulf %215, %218 : vector<2x16x128xf32>
    %220 = arith.addf %214, %219 : vector<2x16x128xf32>
    %c2_88 = arith.constant 2 : index
    %c3_89 = arith.constant 3 : index
    %c0_90 = arith.constant 0 : index
    %c0_91 = arith.constant 0 : index
    %c0_92 = arith.constant 0 : index
    %221 = vector.load %arg0[%c2_88, %c3_89, %c0_90, %c0_91, %c0_92] : memref<3x4x2x18x128xf32, #tpu.memory_space<vmem>>, vector<1x1x2x18x128xf32>
    %222 = vector.shape_cast %221 : vector<1x1x2x18x128xf32> to vector<2x18x128xf32>
    %223 = vector.extract_strided_slice %222 {offsets = [0, 0, 0], sizes = [2, 16, 128], strides = [1, 1, 1]} : vector<2x18x128xf32> to vector<2x16x128xf32>
    %c11 = arith.constant 11 : index
    %c0_93 = arith.constant 0 : index
    %224 = vector.load %arg1[%c11, %c0_93] : memref<36x128xf32, #tpu.memory_space<vmem>>, vector<1x128xf32>
    %225 = vector.shape_cast %224 : vector<1x128xf32> to vector<1x1x128xf32>
    %226 = vector.broadcast %225 : vector<1x1x128xf32> to vector<2x16x128xf32>
    %227 = arith.mulf %223, %226 : vector<2x16x128xf32>
    %228 = arith.addf %220, %227 : vector<2x16x128xf32>
    %229 = vector.extract_strided_slice %222 {offsets = [0, 1, 0], sizes = [2, 16, 128], strides = [1, 1, 1]} : vector<2x18x128xf32> to vector<2x16x128xf32>
    %c23 = arith.constant 23 : index
    %c0_94 = arith.constant 0 : index
    %230 = vector.load %arg1[%c23, %c0_94] : memref<36x128xf32, #tpu.memory_space<vmem>>, vector<1x128xf32>
    %231 = vector.shape_cast %230 : vector<1x128xf32> to vector<1x1x128xf32>
    %232 = vector.broadcast %231 : vector<1x1x128xf32> to vector<2x16x128xf32>
    %233 = arith.mulf %229, %232 : vector<2x16x128xf32>
    %234 = arith.addf %228, %233 : vector<2x16x128xf32>
    %235 = vector.extract_strided_slice %222 {offsets = [0, 2, 0], sizes = [2, 16, 128], strides = [1, 1, 1]} : vector<2x18x128xf32> to vector<2x16x128xf32>
    %c35 = arith.constant 35 : index
    %c0_95 = arith.constant 0 : index
    %236 = vector.load %arg1[%c35, %c0_95] : memref<36x128xf32, #tpu.memory_space<vmem>>, vector<1x128xf32>
    %237 = vector.shape_cast %236 : vector<1x128xf32> to vector<1x1x128xf32>
    %238 = vector.broadcast %237 : vector<1x1x128xf32> to vector<2x16x128xf32>
    %239 = arith.mulf %235, %238 : vector<2x16x128xf32>
    %240 = arith.addf %234, %239 : vector<2x16x128xf32>
    %241 = vector.shape_cast %240 : vector<2x16x128xf32> to vector<32x128xf32>
    %cst_96 = arith.constant dense<0.000000e+00> : vector<128xf32>
    %242 = vector.multi_reduction <add>, %241, %cst_96 [0] : vector<32x128xf32> to vector<128xf32>
    %243 = vector.shape_cast %242 : vector<128xf32> to vector<1x128xf32>
    %244 = arith.mulf %241, %241 : vector<32x128xf32>
    %cst_97 = arith.constant dense<0.000000e+00> : vector<128xf32>
    %245 = vector.multi_reduction <add>, %244, %cst_97 [0] : vector<32x128xf32> to vector<128xf32>
    %246 = vector.shape_cast %245 : vector<128xf32> to vector<1x128xf32>
    %c8_i32 = arith.constant 8 : i32
    %247 = tpu.dynamic_rotate %243 by %c8_i32 dim 1 : vector<1x128xf32>, i32 -> vector<1x128xf32>
    %248 = arith.addf %243, %247 : vector<1x128xf32>
    %c8_i32_98 = arith.constant 8 : i32
    %249 = tpu.dynamic_rotate %246 by %c8_i32_98 dim 1 : vector<1x128xf32>, i32 -> vector<1x128xf32>
    %250 = arith.addf %246, %249 : vector<1x128xf32>
    %c16_i32 = arith.constant 16 : i32
    %251 = tpu.dynamic_rotate %248 by %c16_i32 dim 1 : vector<1x128xf32>, i32 -> vector<1x128xf32>
    %252 = arith.addf %248, %251 : vector<1x128xf32>
    %c16_i32_99 = arith.constant 16 : i32
    %253 = tpu.dynamic_rotate %250 by %c16_i32_99 dim 1 : vector<1x128xf32>, i32 -> vector<1x128xf32>
    %254 = arith.addf %250, %253 : vector<1x128xf32>
    %c32_i32 = arith.constant 32 : i32
    %255 = tpu.dynamic_rotate %252 by %c32_i32 dim 1 : vector<1x128xf32>, i32 -> vector<1x128xf32>
    %256 = arith.addf %252, %255 : vector<1x128xf32>
    %c32_i32_100 = arith.constant 32 : i32
    %257 = tpu.dynamic_rotate %254 by %c32_i32_100 dim 1 : vector<1x128xf32>, i32 -> vector<1x128xf32>
    %258 = arith.addf %254, %257 : vector<1x128xf32>
    %c64_i32 = arith.constant 64 : i32
    %259 = tpu.dynamic_rotate %256 by %c64_i32 dim 1 : vector<1x128xf32>, i32 -> vector<1x128xf32>
    %260 = arith.addf %256, %259 : vector<1x128xf32>
    %c64_i32_101 = arith.constant 64 : i32
    %261 = tpu.dynamic_rotate %258 by %c64_i32_101 dim 1 : vector<1x128xf32>, i32 -> vector<1x128xf32>
    %262 = arith.addf %258, %261 : vector<1x128xf32>
    %cst_102 = arith.constant 0.001953125 : f32
    %263 = vector.broadcast %cst_102 : f32 to vector<1x128xf32>
    %264 = arith.mulf %260, %263 : vector<1x128xf32>
    %cst_103 = arith.constant 0.001953125 : f32
    %265 = vector.broadcast %cst_103 : f32 to vector<1x128xf32>
    %266 = arith.mulf %262, %265 : vector<1x128xf32>
    %267 = arith.mulf %264, %264 : vector<1x128xf32>
    %268 = arith.subf %266, %267 : vector<1x128xf32>
    %c0_104 = arith.constant 0 : index
    %c0_105 = arith.constant 0 : index
    %269 = vector.load %arg2[%c0_104, %c0_105] : memref<2x128xf32, #tpu.memory_space<vmem>>, vector<1x128xf32>
    %c1_106 = arith.constant 1 : index
    %c0_107 = arith.constant 0 : index
    %270 = vector.load %arg2[%c1_106, %c0_107] : memref<2x128xf32, #tpu.memory_space<vmem>>, vector<1x128xf32>
    %cst_108 = arith.constant 9.99999974E-6 : f32
    %271 = vector.broadcast %cst_108 : f32 to vector<1x128xf32>
    %272 = arith.addf %268, %271 : vector<1x128xf32>
    %273 = math.rsqrt %272 : vector<1x128xf32>
    %274 = arith.mulf %269, %273 : vector<1x128xf32>
    %275 = vector.broadcast %264 : vector<1x128xf32> to vector<32x128xf32>
    %276 = arith.subf %241, %275 : vector<32x128xf32>
    %277 = vector.broadcast %274 : vector<1x128xf32> to vector<32x128xf32>
    %278 = arith.mulf %276, %277 : vector<32x128xf32>
    %279 = vector.broadcast %270 : vector<1x128xf32> to vector<32x128xf32>
    %280 = arith.addf %278, %279 : vector<32x128xf32>
    %cst_109 = arith.constant 0.000000e+00 : f32
    %281 = vector.broadcast %cst_109 : f32 to vector<32x128xf32>
    %282 = arith.cmpf ogt, %280, %281 : vector<32x128xf32>
    %cst_110 = arith.constant 0.00999999977 : f32
    %283 = vector.broadcast %cst_110 : f32 to vector<32x128xf32>
    %284 = arith.mulf %283, %280 : vector<32x128xf32>
    %285 = arith.select %282, %280, %284 : vector<32x128xi1>, vector<32x128xf32>
    %c0_111 = arith.constant 0 : index
    %c0_112 = arith.constant 0 : index
    %286 = vector.load %arg3[%c0_111, %c0_112] : memref<32x128xf32, #tpu.memory_space<vmem>>, vector<32x128xf32>
    tpu.vector_store %arg3[%c0_111, %c0_112], %285 {strides = array<i32>} : memref<32x128xf32, #tpu.memory_space<vmem>>, vector<32x128xf32>,
    return
  }
}

</mosaic_0001>

<llo_original>
// kernel: sparable_conv.1
$region0: #{sparable_conv.1}
  #allocation0 [shape = 'u32[]', space=smem, size = 0x4, offset = 0x4, fixed_abs, tag = 'smem constant byte address 0x4 - core index']
  #allocation1 [shape = 'u32[144,128]{1,0:T(1,128)}', space=vmem, size = 0x12000, scoped, tag = 'internal scratch']
  %s0 = inlined_call_operand.vmem [shape: f32[3,4,2,18,128], index: 0, kind: input, shape index: {}]
  %s1 = inlined_call_operand.vmem [shape: f32[36,128], index: 1, kind: input, shape index: {}]
  %s2 = inlined_call_operand.vmem [shape: f32[2,128], index: 2, kind: input, shape index: {}]
  %s3 = inlined_call_operand.vmem [shape: f32[32,128], index: 3, kind: output, shape index: {}]
  %s4 = sld [smem:[#allocation0]]
  $region22: #{sparable_conv.1} parent=0
    _
  %s6 = ssub.s32 1, %s4
  %s7 = scalar_select 0, %s6, %s4
  // Predicated region
  $region2: #{sparable_conv.1} parent=0 // pred_check
    _
  $region3: #{sparable_conv.1} parent=0 // pred_check_branch
    %9 = sbr.rel (0) target = $region5
  $region4: #{sparable_conv.1} parent=0 // pred_region
    _
  $region5: #{sparable_conv.1} parent=0 // pred_fallthru
    _
  // Predicated region
  $region6: #{sparable_conv.1} parent=0 // pred_check
    _
  $region7: #{sparable_conv.1} parent=0 // pred_check_branch
    %11 = sbr.rel (0) target = $region9
  $region8: #{sparable_conv.1} parent=0 // pred_region
    _
  $region9: #{sparable_conv.1} parent=0 // pred_fallthru
    _
  // Predicated region
  $region10: #{sparable_conv.1} parent=0 // pred_check
    _
  $region11: #{sparable_conv.1} parent=0 // pred_check_branch
    %13 = sbr.rel (0) target = $region13
  $region12: #{sparable_conv.1} parent=0 // pred_region
    _
  $region13: #{sparable_conv.1} parent=0 // pred_fallthru
    _
  %v14 = vld [vmem:[%s0] sm:$0xff]
  %v15 = vld [vmem:[%s0 + $0x8] sm:$0xff]
  %v16 = vld [vmem:[%s0 + $0x10] sm:$0x3]
  %v17 = vld [vmem:[%s0 + $0x18] sm:$0xff]
  %v18 = vld [vmem:[%s0 + $0x20] sm:$0xff]
  %v19 = vld [vmem:[%s0 + $0x28] sm:$0x3]
  %v20 = vld [vmem:[%s1] sm:$0x1]
  %v21 = vlaneseq
  %v22 = vshrl.u32 %v21, 7
  %v23 = vsub.s32 0, %v22
  %v24 = vrot.slane %v20, %v23
  %v25 = vmul.f32 %v14, %v24
  %v26 = vmul.f32 %v15, %v24
  %v27 = vmul.f32 %v17, %v24
  %v28 = vmul.f32 %v18, %v24
  %v29 = vadd.f32 %v25, 0.0
  %v30 = vadd.f32 %v26, 0.0
  %v31 = vadd.f32 %v27, 0.0
  %v32 = vadd.f32 %v28, 0.0
  %v33 = vld [vmem:[%s1 + $0xc] sm:$0x1]
  %v34 = vlaneseq
  %v35 = vshrl.u32 %v34, 7
  %v36 = vsub.s32 0, %v35
  %v37 = vrot.slane %v33, %v36
  %v38 = vmul.f32 %v14, %v37
  %v39 = vmul.f32 %v15, %v37
  %v40 = vmul.f32 %v16, %v37
  %v41 = vmul.f32 %v17, %v37
  %v42 = vmul.f32 %v18, %v37
  %v43 = vmul.f32 %v19, %v37
  %vm50 = vcmask 1046528
  %v51 = vrot.slane %v38, 1
  %v52 = vrot.slane %v39, 1
  %v53 = vsel %vm50, %v51, %v52
  %v54 = vrot.slane %v40, 1
  %v55 = vsel %vm50, %v52, %v54
  %v56 = vrot.slane %v41, 1
  %v57 = vrot.slane %v42, 1
  %v58 = vsel %vm50, %v56, %v57
  %v59 = vrot.slane %v43, 1
  %v60 = vsel %vm50, %v57, %v59
  %v65 = vadd.f32 %v29, %v53
  %v66 = vadd.f32 %v30, %v55
  %v67 = vadd.f32 %v31, %v58
  %v68 = vadd.f32 %v32, %v60
  %v69 = vld [vmem:[%s1 + $0x18] sm:$0x1]
  %v70 = vlaneseq
  %v71 = vshrl.u32 %v70, 7
  %v72 = vsub.s32 0, %v71
  %v73 = vrot.slane %v69, %v72
  %v74 = vmul.f32 %v14, %v73
  %v75 = vmul.f32 %v15, %v73
  %v76 = vmul.f32 %v16, %v73
  %v77 = vmul.f32 %v17, %v73
  %v78 = vmul.f32 %v18, %v73
  %v79 = vmul.f32 %v19, %v73
  %vm86 = vcmask 1045504
  %v87 = vrot.slane %v74, 2
  %v88 = vrot.slane %v75, 2
  %v89 = vsel %vm86, %v87, %v88
  %v90 = vrot.slane %v76, 2
  %v91 = vsel %vm86, %v88, %v90
  %v92 = vrot.slane %v77, 2
  %v93 = vrot.slane %v78, 2
  %v94 = vsel %vm86, %v92, %v93
  %v95 = vrot.slane %v79, 2
  %v96 = vsel %vm86, %v93, %v95
  %v101 = vadd.f32 %v65, %v89
  %v102 = vadd.f32 %v66, %v91
  %v103 = vadd.f32 %v67, %v94
  %v104 = vadd.f32 %v68, %v96
  %s105 = scalar_lea.vmem %s0, 192
  %v106 = vld [vmem:[%s105] sm:$0xff]
  %v107 = vld [vmem:[%s105 + $0x8] sm:$0xff]
  %v108 = vld [vmem:[%s105 + $0x10] sm:$0x3]
  %v109 = vld [vmem:[%s105 + $0x18] sm:$0xff]
  %v110 = vld [vmem:[%s105 + $0x20] sm:$0xff]
  %v111 = vld [vmem:[%s105 + $0x28] sm:$0x3]
  %v112 = vld [vmem:[%s1 + $0x4] sm:$0x1]
  %v113 = vlaneseq
  %v114 = vshrl.u32 %v113, 7
  %v115 = vsub.s32 0, %v114
  %v116 = vrot.slane %v112, %v115
  %v117 = vmul.f32 %v106, %v116
  %v118 = vmul.f32 %v107, %v116
  %v119 = vmul.f32 %v109, %v116
  %v120 = vmul.f32 %v110, %v116
  %v121 = vadd.f32 %v101, %v117
  %v122 = vadd.f32 %v102, %v118
  %v123 = vadd.f32 %v103, %v119
  %v124 = vadd.f32 %v104, %v120
  %v125 = vld [vmem:[%s1 + $0x10] sm:$0x1]
  %v126 = vlaneseq
  %v127 = vshrl.u32 %v126, 7
  %v128 = vsub.s32 0, %v127
  %v129 = vrot.slane %v125, %v128
  %v130 = vmul.f32 %v106, %v129
  %v131 = vmul.f32 %v107, %v129
  %v132 = vmul.f32 %v108, %v129
  %v133 = vmul.f32 %v109, %v129
  %v134 = vmul.f32 %v110, %v129
  %v135 = vmul.f32 %v111, %v129
  %v142 = vrot.slane %v130, 1
  %v143 = vrot.slane %v131, 1
  %v144 = vsel %vm50, %v142, %v143
  %v145 = vrot.slane %v132, 1
  %v146 = vsel %vm50, %v143, %v145
  %v147 = vrot.slane %v133, 1
  %v148 = vrot.slane %v134, 1
  %v149 = vsel %vm50, %v147, %v148
  %v150 = vrot.slane %v135, 1
  %v151 = vsel %vm50, %v148, %v150
  %v156 = vadd.f32 %v121, %v144
  %v157 = vadd.f32 %v122, %v146
  %v158 = vadd.f32 %v123, %v149
  %v159 = vadd.f32 %v124, %v151
  %v160 = vld [vmem:[%s1 + $0x1c] sm:$0x1]
  %v161 = vlaneseq
  %v162 = vshrl.u32 %v161, 7
  %v163 = vsub.s32 0, %v162
  %v164 = vrot.slane %v160, %v163
  %v165 = vmul.f32 %v106, %v164
  %v166 = vmul.f32 %v107, %v164
  %v167 = vmul.f32 %v108, %v164
  %v168 = vmul.f32 %v109, %v164
  %v169 = vmul.f32 %v110, %v164
  %v170 = vmul.f32 %v111, %v164
  %v177 = vrot.slane %v165, 2
  %v178 = vrot.slane %v166, 2
  %v179 = vsel %vm86, %v177, %v178
  %v180 = vrot.slane %v167, 2
  %v181 = vsel %vm86, %v178, %v180
  %v182 = vrot.slane %v168, 2
  %v183 = vrot.slane %v169, 2
  %v184 = vsel %vm86, %v182, %v183
  %v185 = vrot.slane %v170, 2
  %v186 = vsel %vm86, %v183, %v185
  %v191 = vadd.f32 %v156, %v179
  %v192 = vadd.f32 %v157, %v181
  %v193 = vadd.f32 %v158, %v184
  %v194 = vadd.f32 %v159, %v186
  %s195 = scalar_lea.vmem %s0, 384
  %v196 = vld [vmem:[%s195] sm:$0xff]
  %v197 = vld [vmem:[%s195 + $0x8] sm:$0xff]
  %v198 = vld [vmem:[%s195 + $0x10] sm:$0x3]
  %v199 = vld [vmem:[%s195 + $0x18] sm:$0xff]
  %v200 = vld [vmem:[%s195 + $0x20] sm:$0xff]
  %v201 = vld [vmem:[%s195 + $0x28] sm:$0x3]
  %v202 = vld [vmem:[%s1 + $0x8] sm:$0x1]
  %v203 = vlaneseq
  %v204 = vshrl.u32 %v203, 7
  %v205 = vsub.s32 0, %v204
  %v206 = vrot.slane %v202, %v205
  %v207 = vmul.f32 %v196, %v206
  %v208 = vmul.f32 %v197, %v206
  %v209 = vmul.f32 %v199, %v206
  %v210 = vmul.f32 %v200, %v206
  %v211 = vadd.f32 %v191, %v207
  %v212 = vadd.f32 %v192, %v208
  %v213 = vadd.f32 %v193, %v209
  %v214 = vadd.f32 %v194, %v210
  %v215 = vld [vmem:[%s1 + $0x14] sm:$0x1]
  %v216 = vlaneseq
  %v217 = vshrl.u32 %v216, 7
  %v218 = vsub.s32 0, %v217
  %v219 = vrot.slane %v215, %v218
  %v220 = vmul.f32 %v196, %v219
  %v221 = vmul.f32 %v197, %v219
  %v222 = vmul.f32 %v198, %v219
  %v223 = vmul.f32 %v199, %v219
  %v224 = vmul.f32 %v200, %v219
  %v225 = vmul.f32 %v201, %v219
  %v232 = vrot.slane %v220, 1
  %v233 = vrot.slane %v221, 1
  %v234 = vsel %vm50, %v232, %v233
  %v235 = vrot.slane %v222, 1
  %v236 = vsel %vm50, %v233, %v235
  %v237 = vrot.slane %v223, 1
  %v238 = vrot.slane %v224, 1
  %v239 = vsel %vm50, %v237, %v238
  %v240 = vrot.slane %v225, 1
  %v241 = vsel %vm50, %v238, %v240
  %v246 = vadd.f32 %v211, %v234
  %v247 = vadd.f32 %v212, %v236
  %v248 = vadd.f32 %v213, %v239
  %v249 = vadd.f32 %v214, %v241
  %v250 = vld [vmem:[%s1 + $0x20] sm:$0x1]
  %v251 = vlaneseq
  %v252 = vshrl.u32 %v251, 7
  %v253 = vsub.s32 0, %v252
  %v254 = vrot.slane %v250, %v253
  %v255 = vmul.f32 %v196, %v254
  %v256 = vmul.f32 %v197, %v254
  %v257 = vmul.f32 %v198, %v254
  %v258 = vmul.f32 %v199, %v254
  %v259 = vmul.f32 %v200, %v254
  %v260 = vmul.f32 %v201, %v254
  %v267 = vrot.slane %v255, 2
  %v268 = vrot.slane %v256, 2
  %v269 = vsel %vm86, %v267, %v268
  %v270 = vrot.slane %v257, 2
  %v271 = vsel %vm86, %v268, %v270
  %v272 = vrot.slane %v258, 2
  %v273 = vrot.slane %v259, 2
  %v274 = vsel %vm86, %v272, %v273
  %v275 = vrot.slane %v260, 2
  %v276 = vsel %vm86, %v273, %v275
  %v281 = vadd.f32 %v246, %v269
  %v282 = vadd.f32 %v247, %v271
  %v283 = vadd.f32 %v248, %v274
  %v284 = vadd.f32 %v249, %v276
  %s285 = scalar_lea.vmem %s0, 48
  %v286 = vld [vmem:[%s285] sm:$0xff]
  %v287 = vld [vmem:[%s285 + $0x8] sm:$0xff]
  %v288 = vld [vmem:[%s285 + $0x10] sm:$0x3]
  %v289 = vld [vmem:[%s285 + $0x18] sm:$0xff]
  %v290 = vld [vmem:[%s285 + $0x20] sm:$0xff]
  %v291 = vld [vmem:[%s285 + $0x28] sm:$0x3]
  %v292 = vld [vmem:[%s1 + $0x1] sm:$0x1]
  %v293 = vlaneseq
  %v294 = vshrl.u32 %v293, 7
  %v295 = vsub.s32 0, %v294
  %v296 = vrot.slane %v292, %v295
  %v297 = vmul.f32 %v286, %v296
  %v298 = vmul.f32 %v287, %v296
  %v299 = vmul.f32 %v289, %v296
  %v300 = vmul.f32 %v290, %v296
  %v301 = vadd.f32 %v281, %v297
  %v302 = vadd.f32 %v282, %v298
  %v303 = vadd.f32 %v283, %v299
  %v304 = vadd.f32 %v284, %v300
  %v305 = vld [vmem:[%s1 + $0xd] sm:$0x1]
  %v306 = vlaneseq
  %v307 = vshrl.u32 %v306, 7
  %v308 = vsub.s32 0, %v307
  %v309 = vrot.slane %v305, %v308
  %v310 = vmul.f32 %v286, %v309
  %v311 = vmul.f32 %v287, %v309
  %v312 = vmul.f32 %v288, %v309
  %v313 = vmul.f32 %v289, %v309
  %v314 = vmul.f32 %v290, %v309
  %v315 = vmul.f32 %v291, %v309
  %v322 = vrot.slane %v310, 1
  %v323 = vrot.slane %v311, 1
  %v324 = vsel %vm50, %v322, %v323
  %v325 = vrot.slane %v312, 1
  %v326 = vsel %vm50, %v323, %v325
  %v327 = vrot.slane %v313, 1
  %v328 = vrot.slane %v314, 1
  %v329 = vsel %vm50, %v327, %v328
  %v330 = vrot.slane %v315, 1
  %v331 = vsel %vm50, %v328, %v330
  %v336 = vadd.f32 %v301, %v324
  %v337 = vadd.f32 %v302, %v326
  %v338 = vadd.f32 %v303, %v329
  %v339 = vadd.f32 %v304, %v331
  %v340 = vld [vmem:[%s1 + $0x19] sm:$0x1]
  %v341 = vlaneseq
  %v342 = vshrl.u32 %v341, 7
  %v343 = vsub.s32 0, %v342
  %v344 = vrot.slane %v340, %v343
  %v345 = vmul.f32 %v286, %v344
  %v346 = vmul.f32 %v287, %v344
  %v347 = vmul.f32 %v288, %v344
  %v348 = vmul.f32 %v289, %v344
  %v349 = vmul.f32 %v290, %v344
  %v350 = vmul.f32 %v291, %v344
  %v357 = vrot.slane %v345, 2
  %v358 = vrot.slane %v346, 2
  %v359 = vsel %vm86, %v357, %v358
  %v360 = vrot.slane %v347, 2
  %v361 = vsel %vm86, %v358, %v360
  %v362 = vrot.slane %v348, 2
  %v363 = vrot.slane %v349, 2
  %v364 = vsel %vm86, %v362, %v363
  %v365 = vrot.slane %v350, 2
  %v366 = vsel %vm86, %v363, %v365
  %v371 = vadd.f32 %v336, %v359
  %v372 = vadd.f32 %v337, %v361
  %v373 = vadd.f32 %v338, %v364
  %v374 = vadd.f32 %v339, %v366
  %s375 = scalar_lea.vmem %s0, 240
  %v376 = vld [vmem:[%s375] sm:$0xff]
  %v377 = vld [vmem:[%s375 + $0x8] sm:$0xff]
  %v378 = vld [vmem:[%s375 + $0x10] sm:$0x3]
  %v379 = vld [vmem:[%s375 + $0x18] sm:$0xff]
  %v380 = vld [vmem:[%s375 + $0x20] sm:$0xff]
  %v381 = vld [vmem:[%s375 + $0x28] sm:$0x3]
  %v382 = vld [vmem:[%s1 + $0x5] sm:$0x1]
  %v383 = vlaneseq
  %v384 = vshrl.u32 %v383, 7
  %v385 = vsub.s32 0, %v384
  %v386 = vrot.slane %v382, %v385
  %v387 = vmul.f32 %v376, %v386
  %v388 = vmul.f32 %v377, %v386
  %v389 = vmul.f32 %v379, %v386
  %v390 = vmul.f32 %v380, %v386
  %v391 = vadd.f32 %v371, %v387
  %v392 = vadd.f32 %v372, %v388
  %v393 = vadd.f32 %v373, %v389
  %v394 = vadd.f32 %v374, %v390
  %v395 = vld [vmem:[%s1 + $0x11] sm:$0x1]
  %v396 = vlaneseq
  %v397 = vshrl.u32 %v396, 7
  %v398 = vsub.s32 0, %v397
  %v399 = vrot.slane %v395, %v398
  %v400 = vmul.f32 %v376, %v399
  %v401 = vmul.f32 %v377, %v399
  %v402 = vmul.f32 %v378, %v399
  %v403 = vmul.f32 %v379, %v399
  %v404 = vmul.f32 %v380, %v399
  %v405 = vmul.f32 %v381, %v399
  %v412 = vrot.slane %v400, 1
  %v413 = vrot.slane %v401, 1
  %v414 = vsel %vm50, %v412, %v413
  %v415 = vrot.slane %v402, 1
  %v416 = vsel %vm50, %v413, %v415
  %v417 = vrot.slane %v403, 1
  %v418 = vrot.slane %v404, 1
  %v419 = vsel %vm50, %v417, %v418
  %v420 = vrot.slane %v405, 1
  %v421 = vsel %vm50, %v418, %v420
  %v426 = vadd.f32 %v391, %v414
  %v427 = vadd.f32 %v392, %v416
  %v428 = vadd.f32 %v393, %v419
  %v429 = vadd.f32 %v394, %v421
  %v430 = vld [vmem:[%s1 + $0x1d] sm:$0x1]
  %v431 = vlaneseq
  %v432 = vshrl.u32 %v431, 7
  %v433 = vsub.s32 0, %v432
  %v434 = vrot.slane %v430, %v433
  %v435 = vmul.f32 %v376, %v434
  %v436 = vmul.f32 %v377, %v434
  %v437 = vmul.f32 %v378, %v434
  %v438 = vmul.f32 %v379, %v434
  %v439 = vmul.f32 %v380, %v434
  %v440 = vmul.f32 %v381, %v434
  %v447 = vrot.slane %v435, 2
  %v448 = vrot.slane %v436, 2
  %v449 = vsel %vm86, %v447, %v448
  %v450 = vrot.slane %v437, 2
  %v451 = vsel %vm86, %v448, %v450
  %v452 = vrot.slane %v438, 2
  %v453 = vrot.slane %v439, 2
  %v454 = vsel %vm86, %v452, %v453
  %v455 = vrot.slane %v440, 2
  %v456 = vsel %vm86, %v453, %v455
  %v461 = vadd.f32 %v426, %v449
  %v462 = vadd.f32 %v427, %v451
  %v463 = vadd.f32 %v428, %v454
  %v464 = vadd.f32 %v429, %v456
  %s465 = scalar_lea.vmem %s0, 432
  %v466 = vld [vmem:[%s465] sm:$0xff]
  %v467 = vld [vmem:[%s465 + $0x8] sm:$0xff]
  %v468 = vld [vmem:[%s465 + $0x10] sm:$0x3]
  %v469 = vld [vmem:[%s465 + $0x18] sm:$0xff]
  %v470 = vld [vmem:[%s465 + $0x20] sm:$0xff]
  %v471 = vld [vmem:[%s465 + $0x28] sm:$0x3]
  %v472 = vld [vmem:[%s1 + $0x9] sm:$0x1]
  %v473 = vlaneseq
  %v474 = vshrl.u32 %v473, 7
  %v475 = vsub.s32 0, %v474
  %v476 = vrot.slane %v472, %v475
  %v477 = vmul.f32 %v466, %v476
  %v478 = vmul.f32 %v467, %v476
  %v479 = vmul.f32 %v469, %v476
  %v480 = vmul.f32 %v470, %v476
  %v481 = vadd.f32 %v461, %v477
  %v482 = vadd.f32 %v462, %v478
  %v483 = vadd.f32 %v463, %v479
  %v484 = vadd.f32 %v464, %v480
  %v485 = vld [vmem:[%s1 + $0x15] sm:$0x1]
  %v486 = vlaneseq
  %v487 = vshrl.u32 %v486, 7
  %v488 = vsub.s32 0, %v487
  %v489 = vrot.slane %v485, %v488
  %v490 = vmul.f32 %v466, %v489
  %v491 = vmul.f32 %v467, %v489
  %v492 = vmul.f32 %v468, %v489
  %v493 = vmul.f32 %v469, %v489
  %v494 = vmul.f32 %v470, %v489
  %v495 = vmul.f32 %v471, %v489
  %v502 = vrot.slane %v490, 1
  %v503 = vrot.slane %v491, 1
  %v504 = vsel %vm50, %v502, %v503
  %v505 = vrot.slane %v492, 1
  %v506 = vsel %vm50, %v503, %v505
  %v507 = vrot.slane %v493, 1
  %v508 = vrot.slane %v494, 1
  %v509 = vsel %vm50, %v507, %v508
  %v510 = vrot.slane %v495, 1
  %v511 = vsel %vm50, %v508, %v510
  %v516 = vadd.f32 %v481, %v504
  %v517 = vadd.f32 %v482, %v506
  %v518 = vadd.f32 %v483, %v509
  %v519 = vadd.f32 %v484, %v511
  %v520 = vld [vmem:[%s1 + $0x21] sm:$0x1]
  %v521 = vlaneseq
  %v522 = vshrl.u32 %v521, 7
  %v523 = vsub.s32 0, %v522
  %v524 = vrot.slane %v520, %v523
  %v525 = vmul.f32 %v466, %v524
  %v526 = vmul.f32 %v467, %v524
  %v527 = vmul.f32 %v468, %v524
  %v528 = vmul.f32 %v469, %v524
  %v529 = vmul.f32 %v470, %v524
  %v530 = vmul.f32 %v471, %v524
  %v537 = vrot.slane %v525, 2
  %v538 = vrot.slane %v526, 2
  %v539 = vsel %vm86, %v537, %v538
  %v540 = vrot.slane %v527, 2
  %v541 = vsel %vm86, %v538, %v540
  %v542 = vrot.slane %v528, 2
  %v543 = vrot.slane %v529, 2
  %v544 = vsel %vm86, %v542, %v543
  %v545 = vrot.slane %v530, 2
  %v546 = vsel %vm86, %v543, %v545
  %v551 = vadd.f32 %v516, %v539
  %v552 = vadd.f32 %v517, %v541
  %v553 = vadd.f32 %v518, %v544
  %v554 = vadd.f32 %v519, %v546
  %s555 = scalar_lea.vmem %s0, 96
  %v556 = vld [vmem:[%s555] sm:$0xff]
  %v557 = vld [vmem:[%s555 + $0x8] sm:$0xff]
  %v558 = vld [vmem:[%s555 + $0x10] sm:$0x3]
  %v559 = vld [vmem:[%s555 + $0x18] sm:$0xff]
  %v560 = vld [vmem:[%s555 + $0x20] sm:$0xff]
  %v561 = vld [vmem:[%s555 + $0x28] sm:$0x3]
  %v562 = vld [vmem:[%s1 + $0x2] sm:$0x1]
  %v563 = vlaneseq
  %v564 = vshrl.u32 %v563, 7
  %v565 = vsub.s32 0, %v564
  %v566 = vrot.slane %v562, %v565
  %v567 = vmul.f32 %v556, %v566
  %v568 = vmul.f32 %v557, %v566
  %v569 = vmul.f32 %v559, %v566
  %v570 = vmul.f32 %v560, %v566
  %v571 = vadd.f32 %v551, %v567
  %v572 = vadd.f32 %v552, %v568
  %v573 = vadd.f32 %v553, %v569
  %v574 = vadd.f32 %v554, %v570
  %v575 = vld [vmem:[%s1 + $0xe] sm:$0x1]
  %v576 = vlaneseq
  %v577 = vshrl.u32 %v576, 7
  %v578 = vsub.s32 0, %v577
  %v579 = vrot.slane %v575, %v578
  %v580 = vmul.f32 %v556, %v579
  %v581 = vmul.f32 %v557, %v579
  %v582 = vmul.f32 %v558, %v579
  %v583 = vmul.f32 %v559, %v579
  %v584 = vmul.f32 %v560, %v579
  %v585 = vmul.f32 %v561, %v579
  %v592 = vrot.slane %v580, 1
  %v593 = vrot.slane %v581, 1
  %v594 = vsel %vm50, %v592, %v593
  %v595 = vrot.slane %v582, 1
  %v596 = vsel %vm50, %v593, %v595
  %v597 = vrot.slane %v583, 1
  %v598 = vrot.slane %v584, 1
  %v599 = vsel %vm50, %v597, %v598
  %v600 = vrot.slane %v585, 1
  %v601 = vsel %vm50, %v598, %v600
  %v606 = vadd.f32 %v571, %v594
  %v607 = vadd.f32 %v572, %v596
  %v608 = vadd.f32 %v573, %v599
  %v609 = vadd.f32 %v574, %v601
  %v610 = vld [vmem:[%s1 + $0x1a] sm:$0x1]
  %v611 = vlaneseq
  %v612 = vshrl.u32 %v611, 7
  %v613 = vsub.s32 0, %v612
  %v614 = vrot.slane %v610, %v613
  %v615 = vmul.f32 %v556, %v614
  %v616 = vmul.f32 %v557, %v614
  %v617 = vmul.f32 %v558, %v614
  %v618 = vmul.f32 %v559, %v614
  %v619 = vmul.f32 %v560, %v614
  %v620 = vmul.f32 %v561, %v614
  %v627 = vrot.slane %v615, 2
  %v628 = vrot.slane %v616, 2
  %v629 = vsel %vm86, %v627, %v628
  %v630 = vrot.slane %v617, 2
  %v631 = vsel %vm86, %v628, %v630
  %v632 = vrot.slane %v618, 2
  %v633 = vrot.slane %v619, 2
  %v634 = vsel %vm86, %v632, %v633
  %v635 = vrot.slane %v620, 2
  %v636 = vsel %vm86, %v633, %v635
  %v641 = vadd.f32 %v606, %v629
  %v642 = vadd.f32 %v607, %v631
  %v643 = vadd.f32 %v608, %v634
  %v644 = vadd.f32 %v609, %v636
  %s645 = scalar_lea.vmem %s0, 288
  %v646 = vld [vmem:[%s645] sm:$0xff]
  %v647 = vld [vmem:[%s645 + $0x8] sm:$0xff]
  %v648 = vld [vmem:[%s645 + $0x10] sm:$0x3]
  %v649 = vld [vmem:[%s645 + $0x18] sm:$0xff]
  %v650 = vld [vmem:[%s645 + $0x20] sm:$0xff]
  %v651 = vld [vmem:[%s645 + $0x28] sm:$0x3]
  %v652 = vld [vmem:[%s1 + $0x6] sm:$0x1]
  %v653 = vlaneseq
  %v654 = vshrl.u32 %v653, 7
  %v655 = vsub.s32 0, %v654
  %v656 = vrot.slane %v652, %v655
  %v657 = vmul.f32 %v646, %v656
  %v658 = vmul.f32 %v647, %v656
  %v659 = vmul.f32 %v649, %v656
  %v660 = vmul.f32 %v650, %v656
  %v661 = vadd.f32 %v641, %v657
  %v662 = vadd.f32 %v642, %v658
  %v663 = vadd.f32 %v643, %v659
  %v664 = vadd.f32 %v644, %v660
  %v665 = vld [vmem:[%s1 + $0x12] sm:$0x1]
  %v666 = vlaneseq
  %v667 = vshrl.u32 %v666, 7
  %v668 = vsub.s32 0, %v667
  %v669 = vrot.slane %v665, %v668
  %v670 = vmul.f32 %v646, %v669
  %v671 = vmul.f32 %v647, %v669
  %v672 = vmul.f32 %v648, %v669
  %v673 = vmul.f32 %v649, %v669
  %v674 = vmul.f32 %v650, %v669
  %v675 = vmul.f32 %v651, %v669
  %v682 = vrot.slane %v670, 1
  %v683 = vrot.slane %v671, 1
  %v684 = vsel %vm50, %v682, %v683
  %v685 = vrot.slane %v672, 1
  %v686 = vsel %vm50, %v683, %v685
  %v687 = vrot.slane %v673, 1
  %v688 = vrot.slane %v674, 1
  %v689 = vsel %vm50, %v687, %v688
  %v690 = vrot.slane %v675, 1
  %v691 = vsel %vm50, %v688, %v690
  %v696 = vadd.f32 %v661, %v684
  %v697 = vadd.f32 %v662, %v686
  %v698 = vadd.f32 %v663, %v689
  %v699 = vadd.f32 %v664, %v691
  %v700 = vld [vmem:[%s1 + $0x1e] sm:$0x1]
  %v701 = vlaneseq
  %v702 = vshrl.u32 %v701, 7
  %v703 = vsub.s32 0, %v702
  %v704 = vrot.slane %v700, %v703
  %v705 = vmul.f32 %v646, %v704
  %v706 = vmul.f32 %v647, %v704
  %v707 = vmul.f32 %v648, %v704
  %v708 = vmul.f32 %v649, %v704
  %v709 = vmul.f32 %v650, %v704
  %v710 = vmul.f32 %v651, %v704
  %v717 = vrot.slane %v705, 2
  %v718 = vrot.slane %v706, 2
  %v719 = vsel %vm86, %v717, %v718
  %v720 = vrot.slane %v707, 2
  %v721 = vsel %vm86, %v718, %v720
  %v722 = vrot.slane %v708, 2
  %v723 = vrot.slane %v709, 2
  %v724 = vsel %vm86, %v722, %v723
  %v725 = vrot.slane %v710, 2
  %v726 = vsel %vm86, %v723, %v725
  %v731 = vadd.f32 %v696, %v719
  %v732 = vadd.f32 %v697, %v721
  %v733 = vadd.f32 %v698, %v724
  %v734 = vadd.f32 %v699, %v726
  %s735 = scalar_lea.vmem %s0, 480
  %v736 = vld [vmem:[%s735] sm:$0xff]
  %v737 = vld [vmem:[%s735 + $0x8] sm:$0xff]
  %v738 = vld [vmem:[%s735 + $0x10] sm:$0x3]
  %v739 = vld [vmem:[%s735 + $0x18] sm:$0xff]
  %v740 = vld [vmem:[%s735 + $0x20] sm:$0xff]
  %v741 = vld [vmem:[%s735 + $0x28] sm:$0x3]
  %v742 = vld [vmem:[%s1 + $0xa] sm:$0x1]
  %v743 = vlaneseq
  %v744 = vshrl.u32 %v743, 7
  %v745 = vsub.s32 0, %v744
  %v746 = vrot.slane %v742, %v745
  %v747 = vmul.f32 %v736, %v746
  %v748 = vmul.f32 %v737, %v746
  %v749 = vmul.f32 %v739, %v746
  %v750 = vmul.f32 %v740, %v746
  %v751 = vadd.f32 %v731, %v747
  %v752 = vadd.f32 %v732, %v748
  %v753 = vadd.f32 %v733, %v749
  %v754 = vadd.f32 %v734, %v750
  %v755 = vld [vmem:[%s1 + $0x16] sm:$0x1]
  %v756 = vlaneseq
  %v757 = vshrl.u32 %v756, 7
  %v758 = vsub.s32 0, %v757
  %v759 = vrot.slane %v755, %v758
  %v760 = vmul.f32 %v736, %v759
  %v761 = vmul.f32 %v737, %v759
  %v762 = vmul.f32 %v738, %v759
  %v763 = vmul.f32 %v739, %v759
  %v764 = vmul.f32 %v740, %v759
  %v765 = vmul.f32 %v741, %v759
  %v772 = vrot.slane %v760, 1
  %v773 = vrot.slane %v761, 1
  %v774 = vsel %vm50, %v772, %v773
  %v775 = vrot.slane %v762, 1
  %v776 = vsel %vm50, %v773, %v775
  %v777 = vrot.slane %v763, 1
  %v778 = vrot.slane %v764, 1
  %v779 = vsel %vm50, %v777, %v778
  %v780 = vrot.slane %v765, 1
  %v781 = vsel %vm50, %v778, %v780
  %v786 = vadd.f32 %v751, %v774
  %v787 = vadd.f32 %v752, %v776
  %v788 = vadd.f32 %v753, %v779
  %v789 = vadd.f32 %v754, %v781
  %v790 = vld [vmem:[%s1 + $0x22] sm:$0x1]
  %v791 = vlaneseq
  %v792 = vshrl.u32 %v791, 7
  %v793 = vsub.s32 0, %v792
  %v794 = vrot.slane %v790, %v793
  %v795 = vmul.f32 %v736, %v794
  %v796 = vmul.f32 %v737, %v794
  %v797 = vmul.f32 %v738, %v794
  %v798 = vmul.f32 %v739, %v794
  %v799 = vmul.f32 %v740, %v794
  %v800 = vmul.f32 %v741, %v794
  %v807 = vrot.slane %v795, 2
  %v808 = vrot.slane %v796, 2
  %v809 = vsel %vm86, %v807, %v808
  %v810 = vrot.slane %v797, 2
  %v811 = vsel %vm86, %v808, %v810
  %v812 = vrot.slane %v798, 2
  %v813 = vrot.slane %v799, 2
  %v814 = vsel %vm86, %v812, %v813
  %v815 = vrot.slane %v800, 2
  %v816 = vsel %vm86, %v813, %v815
  %v821 = vadd.f32 %v786, %v809
  %v822 = vadd.f32 %v787, %v811
  %v823 = vadd.f32 %v788, %v814
  %v824 = vadd.f32 %v789, %v816
  %s825 = scalar_lea.vmem %s0, 144
  %v826 = vld [vmem:[%s825] sm:$0xff]
  %v827 = vld [vmem:[%s825 + $0x8] sm:$0xff]
  %v828 = vld [vmem:[%s825 + $0x10] sm:$0x3]
  %v829 = vld [vmem:[%s825 + $0x18] sm:$0xff]
  %v830 = vld [vmem:[%s825 + $0x20] sm:$0xff]
  %v831 = vld [vmem:[%s825 + $0x28] sm:$0x3]
  %v832 = vld [vmem:[%s1 + $0x3] sm:$0x1]
  %v833 = vlaneseq
  %v834 = vshrl.u32 %v833, 7
  %v835 = vsub.s32 0, %v834
  %v836 = vrot.slane %v832, %v835
  %v837 = vmul.f32 %v826, %v836
  %v838 = vmul.f32 %v827, %v836
  %v839 = vmul.f32 %v829, %v836
  %v840 = vmul.f32 %v830, %v836
  %v841 = vadd.f32 %v821, %v837
  %v842 = vadd.f32 %v822, %v838
  %v843 = vadd.f32 %v823, %v839
  %v844 = vadd.f32 %v824, %v840
  %v845 = vld [vmem:[%s1 + $0xf] sm:$0x1]
  %v846 = vlaneseq
  %v847 = vshrl.u32 %v846, 7
  %v848 = vsub.s32 0, %v847
  %v849 = vrot.slane %v845, %v848
  %v850 = vmul.f32 %v826, %v849
  %v851 = vmul.f32 %v827, %v849
  %v852 = vmul.f32 %v828, %v849
  %v853 = vmul.f32 %v829, %v849
  %v854 = vmul.f32 %v830, %v849
  %v855 = vmul.f32 %v831, %v849
  %v862 = vrot.slane %v850, 1
  %v863 = vrot.slane %v851, 1
  %v864 = vsel %vm50, %v862, %v863
  %v865 = vrot.slane %v852, 1
  %v866 = vsel %vm50, %v863, %v865
  %v867 = vrot.slane %v853, 1
  %v868 = vrot.slane %v854, 1
  %v869 = vsel %vm50, %v867, %v868
  %v870 = vrot.slane %v855, 1
  %v871 = vsel %vm50, %v868, %v870
  %v876 = vadd.f32 %v841, %v864
  %v877 = vadd.f32 %v842, %v866
  %v878 = vadd.f32 %v843, %v869
  %v879 = vadd.f32 %v844, %v871
  %v880 = vld [vmem:[%s1 + $0x1b] sm:$0x1]
  %v881 = vlaneseq
  %v882 = vshrl.u32 %v881, 7
  %v883 = vsub.s32 0, %v882
  %v884 = vrot.slane %v880, %v883
  %v885 = vmul.f32 %v826, %v884
  %v886 = vmul.f32 %v827, %v884
  %v887 = vmul.f32 %v828, %v884
  %v888 = vmul.f32 %v829, %v884
  %v889 = vmul.f32 %v830, %v884
  %v890 = vmul.f32 %v831, %v884
  %v897 = vrot.slane %v885, 2
  %v898 = vrot.slane %v886, 2
  %v899 = vsel %vm86, %v897, %v898
  %v900 = vrot.slane %v887, 2
  %v901 = vsel %vm86, %v898, %v900
  %v902 = vrot.slane %v888, 2
  %v903 = vrot.slane %v889, 2
  %v904 = vsel %vm86, %v902, %v903
  %v905 = vrot.slane %v890, 2
  %v906 = vsel %vm86, %v903, %v905
  %v911 = vadd.f32 %v876, %v899
  %v912 = vadd.f32 %v877, %v901
  %v913 = vadd.f32 %v878, %v904
  %v914 = vadd.f32 %v879, %v906
  %s915 = scalar_lea.vmem %s0, 336
  %v916 = vld [vmem:[%s915] sm:$0xff]
  %v917 = vld [vmem:[%s915 + $0x8] sm:$0xff]
  %v918 = vld [vmem:[%s915 + $0x10] sm:$0x3]
  %v919 = vld [vmem:[%s915 + $0x18] sm:$0xff]
  %v920 = vld [vmem:[%s915 + $0x20] sm:$0xff]
  %v921 = vld [vmem:[%s915 + $0x28] sm:$0x3]
  %v922 = vld [vmem:[%s1 + $0x7] sm:$0x1]
  %v923 = vlaneseq
  %v924 = vshrl.u32 %v923, 7
  %v925 = vsub.s32 0, %v924
  %v926 = vrot.slane %v922, %v925
  %v927 = vmul.f32 %v916, %v926
  %v928 = vmul.f32 %v917, %v926
  %v929 = vmul.f32 %v919, %v926
  %v930 = vmul.f32 %v920, %v926
  %v931 = vadd.f32 %v911, %v927
  %v932 = vadd.f32 %v912, %v928
  %v933 = vadd.f32 %v913, %v929
  %v934 = vadd.f32 %v914, %v930
  %v935 = vld [vmem:[%s1 + $0x13] sm:$0x1]
  %v936 = vlaneseq
  %v937 = vshrl.u32 %v936, 7
  %v938 = vsub.s32 0, %v937
  %v939 = vrot.slane %v935, %v938
  %v940 = vmul.f32 %v916, %v939
  %v941 = vmul.f32 %v917, %v939
  %v942 = vmul.f32 %v918, %v939
  %v943 = vmul.f32 %v919, %v939
  %v944 = vmul.f32 %v920, %v939
  %v945 = vmul.f32 %v921, %v939
  %v952 = vrot.slane %v940, 1
  %v953 = vrot.slane %v941, 1
  %v954 = vsel %vm50, %v952, %v953
  %v955 = vrot.slane %v942, 1
  %v956 = vsel %vm50, %v953, %v955
  %v957 = vrot.slane %v943, 1
  %v958 = vrot.slane %v944, 1
  %v959 = vsel %vm50, %v957, %v958
  %v960 = vrot.slane %v945, 1
  %v961 = vsel %vm50, %v958, %v960
  %v966 = vadd.f32 %v931, %v954
  %v967 = vadd.f32 %v932, %v956
  %v968 = vadd.f32 %v933, %v959
  %v969 = vadd.f32 %v934, %v961
  %v970 = vld [vmem:[%s1 + $0x1f] sm:$0x1]
  %v971 = vlaneseq
  %v972 = vshrl.u32 %v971, 7
  %v973 = vsub.s32 0, %v972
  %v974 = vrot.slane %v970, %v973
  %v975 = vmul.f32 %v916, %v974
  %v976 = vmul.f32 %v917, %v974
  %v977 = vmul.f32 %v918, %v974
  %v978 = vmul.f32 %v919, %v974
  %v979 = vmul.f32 %v920, %v974
  %v980 = vmul.f32 %v921, %v974
  %v987 = vrot.slane %v975, 2
  %v988 = vrot.slane %v976, 2
  %v989 = vsel %vm86, %v987, %v988
  %v990 = vrot.slane %v977, 2
  %v991 = vsel %vm86, %v988, %v990
  %v992 = vrot.slane %v978, 2
  %v993 = vrot.slane %v979, 2
  %v994 = vsel %vm86, %v992, %v993
  %v995 = vrot.slane %v980, 2
  %v996 = vsel %vm86, %v993, %v995
  %v1001 = vadd.f32 %v966, %v989
  %v1002 = vadd.f32 %v967, %v991
  %v1003 = vadd.f32 %v968, %v994
  %v1004 = vadd.f32 %v969, %v996
  %s1005 = scalar_lea.vmem %s0, 528
  %v1006 = vld [vmem:[%s1005] sm:$0xff]
  %v1007 = vld [vmem:[%s1005 + $0x8] sm:$0xff]
  %v1008 = vld [vmem:[%s1005 + $0x10] sm:$0x3]
  %v1009 = vld [vmem:[%s1005 + $0x18] sm:$0xff]
  %v1010 = vld [vmem:[%s1005 + $0x20] sm:$0xff]
  %v1011 = vld [vmem:[%s1005 + $0x28] sm:$0x3]
  %v1012 = vld [vmem:[%s1 + $0xb] sm:$0x1]
  %v1013 = vlaneseq
  %v1014 = vshrl.u32 %v1013, 7
  %v1015 = vsub.s32 0, %v1014
  %v1016 = vrot.slane %v1012, %v1015
  %v1017 = vmul.f32 %v1006, %v1016
  %v1018 = vmul.f32 %v1007, %v1016
  %v1019 = vmul.f32 %v1009, %v1016
  %v1020 = vmul.f32 %v1010, %v1016
  %v1021 = vadd.f32 %v1001, %v1017
  %v1022 = vadd.f32 %v1002, %v1018
  %v1023 = vadd.f32 %v1003, %v1019
  %v1024 = vadd.f32 %v1004, %v1020
  %v1025 = vld [vmem:[%s1 + $0x17] sm:$0x1]
  %v1026 = vlaneseq
  %v1027 = vshrl.u32 %v1026, 7
  %v1028 = vsub.s32 0, %v1027
  %v1029 = vrot.slane %v1025, %v1028
  %v1030 = vmul.f32 %v1006, %v1029
  %v1031 = vmul.f32 %v1007, %v1029
  %v1032 = vmul.f32 %v1008, %v1029
  %v1033 = vmul.f32 %v1009, %v1029
  %v1034 = vmul.f32 %v1010, %v1029
  %v1035 = vmul.f32 %v1011, %v1029
  %v1042 = vrot.slane %v1030, 1
  %v1043 = vrot.slane %v1031, 1
  %v1044 = vsel %vm50, %v1042, %v1043
  %v1045 = vrot.slane %v1032, 1
  %v1046 = vsel %vm50, %v1043, %v1045
  %v1047 = vrot.slane %v1033, 1
  %v1048 = vrot.slane %v1034, 1
  %v1049 = vsel %vm50, %v1047, %v1048
  %v1050 = vrot.slane %v1035, 1
  %v1051 = vsel %vm50, %v1048, %v1050
  %v1056 = vadd.f32 %v1021, %v1044
  %v1057 = vadd.f32 %v1022, %v1046
  %v1058 = vadd.f32 %v1023, %v1049
  %v1059 = vadd.f32 %v1024, %v1051
  %v1060 = vld [vmem:[%s1 + $0x23] sm:$0x1]
  %v1061 = vlaneseq
  %v1062 = vshrl.u32 %v1061, 7
  %v1063 = vsub.s32 0, %v1062
  %v1064 = vrot.slane %v1060, %v1063
  %v1065 = vmul.f32 %v1006, %v1064
  %v1066 = vmul.f32 %v1007, %v1064
  %v1067 = vmul.f32 %v1008, %v1064
  %v1068 = vmul.f32 %v1009, %v1064
  %v1069 = vmul.f32 %v1010, %v1064
  %v1070 = vmul.f32 %v1011, %v1064
  %v1077 = vrot.slane %v1065, 2
  %v1078 = vrot.slane %v1066, 2
  %v1079 = vsel %vm86, %v1077, %v1078
  %v1080 = vrot.slane %v1067, 2
  %v1081 = vsel %vm86, %v1078, %v1080
  %v1082 = vrot.slane %v1068, 2
  %v1083 = vrot.slane %v1069, 2
  %v1084 = vsel %vm86, %v1082, %v1083
  %v1085 = vrot.slane %v1070, 2
  %v1086 = vsel %vm86, %v1083, %v1085
  %v1091 = vadd.f32 %v1056, %v1079
  %v1092 = vadd.f32 %v1057, %v1081
  %v1093 = vadd.f32 %v1058, %v1084
  %v1094 = vadd.f32 %v1059, %v1086
  %v1095 = vadd.f32 %v1091, %v1092
  %v1096 = vadd.f32 %v1095, %v1093
  %v1097 = vadd.f32 %v1096, %v1094
  %v1098 = vrot.slane %v1097, 4
  %v1099 = vadd.f32 %v1097, %v1098
  %v1100 = vrot.slane %v1099, 2
  %v1101 = vadd.f32 %v1099, %v1100
  %v1102 = vrot.slane %v1101, 1
  %v1103 = vadd.f32 %v1101, %v1102
  %v1104 = vmul.f32 %v1091, %v1091
  %v1105 = vmul.f32 %v1092, %v1092
  %v1106 = vmul.f32 %v1093, %v1093
  %v1107 = vmul.f32 %v1094, %v1094
  %v1108 = vadd.f32 %v1104, %v1105
  %v1109 = vadd.f32 %v1108, %v1106
  %v1110 = vadd.f32 %v1109, %v1107
  %v1111 = vrot.slane %v1110, 4
  %v1112 = vadd.f32 %v1110, %v1111
  %v1113 = vrot.slane %v1112, 2
  %v1114 = vadd.f32 %v1112, %v1113
  %v1115 = vrot.slane %v1114, 1
  %v1116 = vadd.f32 %v1114, %v1115
  %1117 = vrot.lane.b32.xlu0 %v1103, 8
  %v1118 = vpop.permute.xlu0 %1117
  %v1119 = vadd.f32 %v1103, %v1118
  %1120 = vrot.lane.b32.xlu0 %v1116, 8
  %v1121 = vpop.permute.xlu0 %1120
  %v1122 = vadd.f32 %v1116, %v1121
  %1123 = vrot.lane.b32.xlu0 %v1119, 16
  %v1124 = vpop.permute.xlu0 %1123
  %v1125 = vadd.f32 %v1119, %v1124
  %1126 = vrot.lane.b32.xlu0 %v1122, 16
  %v1127 = vpop.permute.xlu0 %1126
  %v1128 = vadd.f32 %v1122, %v1127
  %1129 = vrot.lane.b32.xlu0 %v1125, 32
  %v1130 = vpop.permute.xlu0 %1129
  %v1131 = vadd.f32 %v1125, %v1130
  %1132 = vrot.lane.b32.xlu0 %v1128, 32
  %v1133 = vpop.permute.xlu0 %1132
  %v1134 = vadd.f32 %v1128, %v1133
  %1135 = vrot.lane.b32.xlu0 %v1131, 64
  %v1136 = vpop.permute.xlu0 %1135
  %v1137 = vadd.f32 %v1131, %v1136
  %1138 = vrot.lane.b32.xlu0 %v1134, 64
  %v1139 = vpop.permute.xlu0 %1138
  %v1140 = vadd.f32 %v1134, %v1139
  %v1141 = vmul.f32 %v1137, 0.001953125
  %v1142 = vmul.f32 %v1140, 0.001953125
  %v1143 = vmul.f32 %v1141, %v1141
  %v1144 = vsub.f32 %v1142, %v1143
  %v1145 = vld [vmem:[%s2] sm:$0x1]
  %v1146 = vld [vmem:[%s2 + $0x1] sm:$0x1]
  %v1147 = vadd.f32 %v1144, 1e-05
  %v1148 = vrsqrt.pop %v1147
  %v1149 = vmul.f32 %v1145, %v1148
  %v1150 = vlaneseq
  %v1151 = vshrl.u32 %v1150, 7
  %v1152 = vsub.s32 0, %v1151
  %v1153 = vrot.slane %v1141, %v1152
  %v1154 = vsub.f32 %v1091, %v1153
  %v1155 = vsub.f32 %v1092, %v1153
  %v1156 = vsub.f32 %v1093, %v1153
  %v1157 = vsub.f32 %v1094, %v1153
  %v1158 = vlaneseq
  %v1159 = vshrl.u32 %v1158, 7
  %v1160 = vsub.s32 0, %v1159
  %v1161 = vrot.slane %v1149, %v1160
  %v1162 = vmul.f32 %v1154, %v1161
  %v1163 = vmul.f32 %v1155, %v1161
  %v1164 = vmul.f32 %v1156, %v1161
  %v1165 = vmul.f32 %v1157, %v1161
  %v1166 = vlaneseq
  %v1167 = vshrl.u32 %v1166, 7
  %v1168 = vsub.s32 0, %v1167
  %v1169 = vrot.slane %v1146, %v1168
  %v1170 = vadd.f32 %v1162, %v1169
  %v1171 = vadd.f32 %v1163, %v1169
  %v1172 = vadd.f32 %v1164, %v1169
  %v1173 = vadd.f32 %v1165, %v1169
  %vm1174 = vcmp.gt.f32.partialorder %v1170, 0.0
  %vm1175 = vcmp.gt.f32.partialorder %v1171, 0.0
  %vm1176 = vcmp.gt.f32.partialorder %v1172, 0.0
  %vm1177 = vcmp.gt.f32.partialorder %v1173, 0.0
  %v1178 = vmul.f32 %v1170, 0.01
  %v1179 = vmul.f32 %v1171, 0.01
  %v1180 = vmul.f32 %v1172, 0.01
  %v1181 = vmul.f32 %v1173, 0.01
  %v1182 = vsel %vm1174, %v1170, %v1178
  %v1183 = vsel %vm1175, %v1171, %v1179
  %v1184 = vsel %vm1176, %v1172, %v1180
  %v1185 = vsel %vm1177, %v1173, %v1181
  %1186 = vst [vmem:[%s3] sm:$0xff] %v1182
  %1187 = vst [vmem:[%s3 + $0x8] sm:$0xff] %v1183
  %1188 = vst [vmem:[%s3 + $0x10] sm:$0xff] %v1184
  %1189 = vst [vmem:[%s3 + $0x18] sm:$0xff] %v1185
  // Predicated region
  $region14: #{sparable_conv.1} parent=0 // pred_check
    _
  $region15: #{sparable_conv.1} parent=0 // pred_check_branch
    %1191 = sbr.rel (0) target = $region17
  $region16: #{sparable_conv.1} parent=0 // pred_region
    _
  $region17: #{sparable_conv.1} parent=0 // pred_fallthru
    _
  // Predicated region
  $region18: #{sparable_conv.1} parent=0 // pred_check
    _
  $region19: #{sparable_conv.1} parent=0 // pred_check_branch
    %1193 = sbr.rel (0) target = $region21
  $region20: #{sparable_conv.1} parent=0 // pred_region
    _
  $region21: #{sparable_conv.1} parent=0 // pred_fallthru
    _

</llo_original>
